<compile_context>
chip_gen: v6e
topology: v6e:2x2x1
jax: 0.10.0
libtpu: 0.0.40
codegen_flags: <defaults>
</compile_context>

<pallas_src>
import jax
import jax.numpy as jnp
from jax.experimental import pallas as pl
from jax.experimental.pallas import tpu as pltpu


# ------------------------------ fused kernel -------------------------------
def _make_fused_kernel(h, w):
    """Kernel for one batch image on an (h, w) canvas (here 16x16 -> 256 lanes)."""
    hw = h * w
    shifts = (0, 1, w, w + 1)          # (dh, dw) = (0,0), (0,1), (1,0), (1,1)
    ho, wo = h - 3, w - 3              # spatial extent after three valid 2x2 convs

    def kernel(x_ref, w1_ref, b1_ref, w2_ref, b2_ref,
               w3_ref, b3_ref, w4_ref, b4_ref, o_ref):
        # x_ref: (1, 2, hw) -- channels on sublanes, flattened spatial on lanes.
        x = x_ref[0]                                            # (2, hw)

        # ---- layer 1: 1x1 conv Cin=2 -> Cout=4, VPU broadcast-MACs + ReLU ----
        w1 = w1_ref[...]                                        # (4, 2)
        a = w1[:, 0:1] * x[0:1, :] + w1[:, 1:2] * x[1:2, :] + b1_ref[...]
        a = jnp.maximum(a, 0.0)                                 # (4, hw)

        def shift_left(v, s):
            # shifted[:, p] = v[:, p + s] for p < hw - s; the wrapped tail only
            # feeds out-of-frame canvas positions that are never read at valid
            # output positions of the next layer.
            if s == 0:
                return v
            return jnp.concatenate([v[:, s:], v[:, :s]], axis=-1)

        def conv2x2_relu(v, w_r, b_r):
            # Patch matrix rows ordered (dh, dw)-major, cin-minor, matching the
            # packed weight layout produced by pack_params().
            patches = jnp.concatenate([shift_left(v, s) for s in shifts], axis=0)
            y = jnp.dot(w_r[...], patches,
                        preferred_element_type=jnp.float32)     # (Cout, hw), lane-dense
            return jnp.maximum(y + b_r[...], 0.0)

        a = conv2x2_relu(a, w2_ref, b2_ref)                     # (8, hw)
        a = conv2x2_relu(a, w3_ref, b3_ref)                     # (8, hw)
        a = conv2x2_relu(a, w4_ref, b4_ref)                     # (16, hw)

        # ---- extract the valid (ho, wo) window; write NCHW directly ----
        for r in range(ho):
            o_ref[0, :, r, :] = a[:, r * w: r * w + wo]

    return kernel


# ------------------------------ wrapper -------------------------------------
def pack_params(params):
    """One-time repack of PyTorch-style (OIHW) weights for the fused kernel."""
    (w1, b1), (w2, b2), (w3, b3), (w4, b4) = params

    def pack_k2(wk):
        # (Cout, Cin, 2, 2) -> (Cout, 4*Cin), column index = (dh*2 + dw)*Cin + ci
        cout, cin, kh, kw = wk.shape
        return jnp.transpose(wk, (0, 2, 3, 1)).reshape(cout, kh * kw * cin)

    return dict(
        w1=w1.reshape(4, 2),   b1=b1.reshape(4, 1),
        w2=pack_k2(w2),        b2=b2.reshape(8, 1),
        w3=pack_k2(w3),        b3=b3.reshape(8, 1),
        w4=pack_k2(w4),        b4=b4.reshape(16, 1),
    )


@jax.jit
def net_conv2d_3_forward(x_nchw, packed):
    n, cin, h, w = x_nchw.shape
    assert cin == 2
    hw = h * w
    ho, wo = h - 3, w - 3

    # Contiguous reshape (free): channels stay on sublanes, spatial flattens to lanes.
    x_flat = x_nchw.reshape(n, cin, hw)

    const = lambda i: (0, 0)  # weights/biases: same block every grid step (stay resident)
    return pl.pallas_call(
        _make_fused_kernel(h, w),
        out_shape=jax.ShapeDtypeStruct((n, 16, ho, wo), jnp.float32),
        grid=(n,),
        in_specs=[
            pl.BlockSpec((1, cin, hw), lambda i: (i, 0, 0)),
            pl.BlockSpec((4, 2), const),  pl.BlockSpec((4, 1), const),
            pl.BlockSpec((8, 16), const), pl.BlockSpec((8, 1), const),
            pl.BlockSpec((8, 32), const), pl.BlockSpec((8, 1), const),
            pl.BlockSpec((16, 32), const), pl.BlockSpec((16, 1), const),
        ],
        out_specs=pl.BlockSpec((1, 16, ho, wo), lambda i: (i, 0, 0, 0)),
        compiler_params=pltpu.CompilerParams(
            dimension_semantics=("parallel",)),   # one image per TC on v7x
    )(x_flat, packed["w1"], packed["b1"], packed["w2"], packed["b2"],
      packed["w3"], packed["b3"], packed["w4"], packed["b4"])


# ------------------------------ params & reference --------------------------
def init_params(key):
    """Deterministic PyTorch-style init; weights kept in OIHW like nn.Conv2d."""
    specs = [  # (Cout, Cin, k)
        (4, 2, 1),
        (8, 4, 2),
        (8, 8, 2),
        (16, 8, 2),
    ]
    params = []
    for cout, cin, k in specs:
        key, kw_, kb_ = jax.random.split(key, 3)
        fan_in = cin * k * k
        bound = 1.0 / (fan_in ** 0.5)
        wgt = jax.random.uniform(kw_, (cout, cin, k, k), jnp.float32, -bound, bound)
        b = jax.random.uniform(kb_, (cout,), jnp.float32, -bound, bound)
        params.append((wgt, b))
    return params


def reference_forward(x_nchw, params):
    """Pure-XLA reference (lax conv) for a sanity check."""
    x = x_nchw
    for w_oihw, b in params:
        x = jax.lax.conv_general_dilated(
            x, w_oihw, window_strides=(1, 1), padding="VALID",
            dimension_numbers=("NCHW", "OIHW", "NCHW"))
        x = jnp.maximum(x + b[None, :, None, None], 0.0)
    return x


if __name__ == "__main__":
    root = jax.random.PRNGKey(0)
    k_in, k_par = jax.random.split(root)

    # Small input consistent with the module: Cin=2, NCHW.
    x = jax.random.normal(k_in, (2, 2, 16, 16), jnp.float32)
    params = init_params(k_par)
    packed = pack_params(params)

    out = jax.block_until_ready(net_conv2d_3_forward(x, packed))
    assert out.shape == (2, 16, 13, 13), out.shape

    ref = jax.block_until_ready(reference_forward(x, params))
    assert jnp.allclose(out, ref, rtol=1e-3, atol=1e-3), \
        float(jnp.max(jnp.abs(out - ref)))

    print("KERNEL_OK")
</pallas_src>

<mosaic_0001>
module attributes {stable_mosaic.version = 11 : i64} {
  func.func @kernel(%arg0: i32, %arg1: memref<1x2x256xf32, #tpu.memory_space<vmem>>, %arg2: memref<4x2xf32, #tpu.memory_space<vmem>>, %arg3: memref<4x1xf32, #tpu.memory_space<vmem>>, %arg4: memref<8x16xf32, #tpu.memory_space<vmem>>, %arg5: memref<8x1xf32, #tpu.memory_space<vmem>>, %arg6: memref<8x32xf32, #tpu.memory_space<vmem>>, %arg7: memref<8x1xf32, #tpu.memory_space<vmem>>, %arg8: memref<16x32xf32, #tpu.memory_space<vmem>>, %arg9: memref<16x1xf32, #tpu.memory_space<vmem>>, %arg10: memref<1x16x13x13xf32, #tpu.memory_space<vmem>>) attributes {dimension_semantics = [#tpu.dimension_semantics<parallel>], iteration_bounds = array<i64: 2>, scalar_prefetch = 0 : i64, scratch_operands = 0 : i64, tpu.core_type = #tpu.core_type<tc>, window_params = [{transform_indices = @transform_0, window_bounds = array<i64: 1, 2, 256>}, {pipeline_mode = #tpu.pipeline_mode<synchronous>, transform_indices = @transform_1, window_bounds = array<i64: 4, 2>}, {pipeline_mode = #tpu.pipeline_mode<synchronous>, transform_indices = @transform_2, window_bounds = array<i64: 4, 1>}, {pipeline_mode = #tpu.pipeline_mode<synchronous>, transform_indices = @transform_3, window_bounds = array<i64: 8, 16>}, {pipeline_mode = #tpu.pipeline_mode<synchronous>, transform_indices = @transform_4, window_bounds = array<i64: 8, 1>}, {pipeline_mode = #tpu.pipeline_mode<synchronous>, transform_indices = @transform_5, window_bounds = array<i64: 8, 32>}, {pipeline_mode = #tpu.pipeline_mode<synchronous>, transform_indices = @transform_6, window_bounds = array<i64: 8, 1>}, {pipeline_mode = #tpu.pipeline_mode<synchronous>, transform_indices = @transform_7, window_bounds = array<i64: 16, 32>}, {pipeline_mode = #tpu.pipeline_mode<synchronous>, transform_indices = @transform_8, window_bounds = array<i64: 16, 1>}, {transform_indices = @transform_9, window_bounds = array<i64: 1, 16, 13, 13>}]} {
    %c0 = arith.constant 0 : index
    %c0_0 = arith.constant 0 : index
    %c0_1 = arith.constant 0 : index
    %0 = vector.load %arg1[%c0, %c0_0, %c0_1] : memref<1x2x256xf32, #tpu.memory_space<vmem>>, vector<1x2x256xf32>
    %1 = vector.shape_cast %0 : vector<1x2x256xf32> to vector<2x256xf32>
    %c0_2 = arith.constant 0 : index
    %c0_3 = arith.constant 0 : index
    %2 = vector.load %arg2[%c0_2, %c0_3] : memref<4x2xf32, #tpu.memory_space<vmem>>, vector<4x2xf32>
    %3 = vector.extract_strided_slice %2 {offsets = [0, 0], sizes = [4, 1], strides = [1, 1]} : vector<4x2xf32> to vector<4x1xf32>
    %4 = vector.extract_strided_slice %1 {offsets = [0, 0], sizes = [1, 256], strides = [1, 1]} : vector<2x256xf32> to vector<1x256xf32>
    %5 = vector.broadcast %3 : vector<4x1xf32> to vector<4x256xf32>
    %6 = vector.broadcast %4 : vector<1x256xf32> to vector<4x256xf32>
    %7 = arith.mulf %5, %6 : vector<4x256xf32>
    %8 = vector.extract_strided_slice %2 {offsets = [0, 1], sizes = [4, 1], strides = [1, 1]} : vector<4x2xf32> to vector<4x1xf32>
    %9 = vector.extract_strided_slice %1 {offsets = [1, 0], sizes = [1, 256], strides = [1, 1]} : vector<2x256xf32> to vector<1x256xf32>
    %10 = vector.broadcast %8 : vector<4x1xf32> to vector<4x256xf32>
    %11 = vector.broadcast %9 : vector<1x256xf32> to vector<4x256xf32>
    %12 = arith.mulf %10, %11 : vector<4x256xf32>
    %13 = arith.addf %7, %12 : vector<4x256xf32>
    %c0_4 = arith.constant 0 : index
    %c0_5 = arith.constant 0 : index
    %14 = vector.load %arg3[%c0_4, %c0_5] : memref<4x1xf32, #tpu.memory_space<vmem>>, vector<4x1xf32>
    %15 = vector.broadcast %14 : vector<4x1xf32> to vector<4x256xf32>
    %16 = arith.addf %13, %15 : vector<4x256xf32>
    %cst = arith.constant 0.000000e+00 : f32
    %17 = vector.broadcast %cst : f32 to vector<4x256xf32>
    %18 = arith.maximumf %16, %17 : vector<4x256xf32>
    %19 = vector.extract_strided_slice %18 {offsets = [0, 1], sizes = [4, 255], strides = [1, 1]} : vector<4x256xf32> to vector<4x255xf32>
    %20 = vector.extract_strided_slice %18 {offsets = [0, 0], sizes = [4, 1], strides = [1, 1]} : vector<4x256xf32> to vector<4x1xf32>
    %21 = tpu.concatenate %19, %20 in 1 : vector<4x255xf32>, vector<4x1xf32> -> vector<4x256xf32>
    %22 = vector.extract_strided_slice %18 {offsets = [0, 16], sizes = [4, 240], strides = [1, 1]} : vector<4x256xf32> to vector<4x240xf32>
    %23 = vector.extract_strided_slice %18 {offsets = [0, 0], sizes = [4, 16], strides = [1, 1]} : vector<4x256xf32> to vector<4x16xf32>
    %24 = tpu.concatenate %22, %23 in 1 : vector<4x240xf32>, vector<4x16xf32> -> vector<4x256xf32>
    %25 = vector.extract_strided_slice %18 {offsets = [0, 17], sizes = [4, 239], strides = [1, 1]} : vector<4x256xf32> to vector<4x239xf32>
    %26 = vector.extract_strided_slice %18 {offsets = [0, 0], sizes = [4, 17], strides = [1, 1]} : vector<4x256xf32> to vector<4x17xf32>
    %27 = tpu.concatenate %25, %26 in 1 : vector<4x239xf32>, vector<4x17xf32> -> vector<4x256xf32>
    %28 = tpu.concatenate %18, %21, %24, %27 in 0 : vector<4x256xf32>, vector<4x256xf32>, vector<4x256xf32>, vector<4x256xf32> -> vector<16x256xf32>
    %c0_6 = arith.constant 0 : index
    %c0_7 = arith.constant 0 : index
    %29 = vector.load %arg4[%c0_6, %c0_7] : memref<8x16xf32, #tpu.memory_space<vmem>>, vector<8x16xf32>
    %cst_8 = arith.constant dense<0.000000e+00> : vector<8x256xf32>
    %30 = tpu.matmul %29, %28, %cst_8 {dimension_numbers = #tpu.dot_dimension_numbers<[1], [0], [0], [1], [0, 0, 1, 1], [], []>} : vector<8x16xf32>, vector<16x256xf32>, vector<8x256xf32> -> vector<8x256xf32>
    %c0_9 = arith.constant 0 : index
    %c0_10 = arith.constant 0 : index
    %31 = vector.load %arg5[%c0_9, %c0_10] : memref<8x1xf32, #tpu.memory_space<vmem>>, vector<8x1xf32>
    %32 = vector.broadcast %31 : vector<8x1xf32> to vector<8x256xf32>
    %33 = arith.addf %30, %32 : vector<8x256xf32>
    %cst_11 = arith.constant 0.000000e+00 : f32
    %34 = vector.broadcast %cst_11 : f32 to vector<8x256xf32>
    %35 = arith.maximumf %33, %34 : vector<8x256xf32>
    %36 = vector.extract_strided_slice %35 {offsets = [0, 1], sizes = [8, 255], strides = [1, 1]} : vector<8x256xf32> to vector<8x255xf32>
    %37 = vector.extract_strided_slice %35 {offsets = [0, 0], sizes = [8, 1], strides = [1, 1]} : vector<8x256xf32> to vector<8x1xf32>
    %38 = tpu.concatenate %36, %37 in 1 : vector<8x255xf32>, vector<8x1xf32> -> vector<8x256xf32>
    %39 = vector.extract_strided_slice %35 {offsets = [0, 16], sizes = [8, 240], strides = [1, 1]} : vector<8x256xf32> to vector<8x240xf32>
    %40 = vector.extract_strided_slice %35 {offsets = [0, 0], sizes = [8, 16], strides = [1, 1]} : vector<8x256xf32> to vector<8x16xf32>
    %41 = tpu.concatenate %39, %40 in 1 : vector<8x240xf32>, vector<8x16xf32> -> vector<8x256xf32>
    %42 = vector.extract_strided_slice %35 {offsets = [0, 17], sizes = [8, 239], strides = [1, 1]} : vector<8x256xf32> to vector<8x239xf32>
    %43 = vector.extract_strided_slice %35 {offsets = [0, 0], sizes = [8, 17], strides = [1, 1]} : vector<8x256xf32> to vector<8x17xf32>
    %44 = tpu.concatenate %42, %43 in 1 : vector<8x239xf32>, vector<8x17xf32> -> vector<8x256xf32>
    %45 = tpu.concatenate %35, %38, %41, %44 in 0 : vector<8x256xf32>, vector<8x256xf32>, vector<8x256xf32>, vector<8x256xf32> -> vector<32x256xf32>
    %c0_12 = arith.constant 0 : index
    %c0_13 = arith.constant 0 : index
    %46 = vector.load %arg6[%c0_12, %c0_13] : memref<8x32xf32, #tpu.memory_space<vmem>>, vector<8x32xf32>
    %cst_14 = arith.constant dense<0.000000e+00> : vector<8x256xf32>
    %47 = tpu.matmul %46, %45, %cst_14 {dimension_numbers = #tpu.dot_dimension_numbers<[1], [0], [0], [1], [0, 0, 1, 1], [], []>} : vector<8x32xf32>, vector<32x256xf32>, vector<8x256xf32> -> vector<8x256xf32>
    %c0_15 = arith.constant 0 : index
    %c0_16 = arith.constant 0 : index
    %48 = vector.load %arg7[%c0_15, %c0_16] : memref<8x1xf32, #tpu.memory_space<vmem>>, vector<8x1xf32>
    %49 = vector.broadcast %48 : vector<8x1xf32> to vector<8x256xf32>
    %50 = arith.addf %47, %49 : vector<8x256xf32>
    %cst_17 = arith.constant 0.000000e+00 : f32
    %51 = vector.broadcast %cst_17 : f32 to vector<8x256xf32>
    %52 = arith.maximumf %50, %51 : vector<8x256xf32>
    %53 = vector.extract_strided_slice %52 {offsets = [0, 1], sizes = [8, 255], strides = [1, 1]} : vector<8x256xf32> to vector<8x255xf32>
    %54 = vector.extract_strided_slice %52 {offsets = [0, 0], sizes = [8, 1], strides = [1, 1]} : vector<8x256xf32> to vector<8x1xf32>
    %55 = tpu.concatenate %53, %54 in 1 : vector<8x255xf32>, vector<8x1xf32> -> vector<8x256xf32>
    %56 = vector.extract_strided_slice %52 {offsets = [0, 16], sizes = [8, 240], strides = [1, 1]} : vector<8x256xf32> to vector<8x240xf32>
    %57 = vector.extract_strided_slice %52 {offsets = [0, 0], sizes = [8, 16], strides = [1, 1]} : vector<8x256xf32> to vector<8x16xf32>
    %58 = tpu.concatenate %56, %57 in 1 : vector<8x240xf32>, vector<8x16xf32> -> vector<8x256xf32>
    %59 = vector.extract_strided_slice %52 {offsets = [0, 17], sizes = [8, 239], strides = [1, 1]} : vector<8x256xf32> to vector<8x239xf32>
    %60 = vector.extract_strided_slice %52 {offsets = [0, 0], sizes = [8, 17], strides = [1, 1]} : vector<8x256xf32> to vector<8x17xf32>
    %61 = tpu.concatenate %59, %60 in 1 : vector<8x239xf32>, vector<8x17xf32> -> vector<8x256xf32>
    %62 = tpu.concatenate %52, %55, %58, %61 in 0 : vector<8x256xf32>, vector<8x256xf32>, vector<8x256xf32>, vector<8x256xf32> -> vector<32x256xf32>
    %c0_18 = arith.constant 0 : index
    %c0_19 = arith.constant 0 : index
    %63 = vector.load %arg8[%c0_18, %c0_19] : memref<16x32xf32, #tpu.memory_space<vmem>>, vector<16x32xf32>
    %cst_20 = arith.constant dense<0.000000e+00> : vector<16x256xf32>
    %64 = tpu.matmul %63, %62, %cst_20 {dimension_numbers = #tpu.dot_dimension_numbers<[1], [0], [0], [1], [0, 0, 1, 1], [], []>} : vector<16x32xf32>, vector<32x256xf32>, vector<16x256xf32> -> vector<16x256xf32>
    %c0_21 = arith.constant 0 : index
    %c0_22 = arith.constant 0 : index
    %65 = vector.load %arg9[%c0_21, %c0_22] : memref<16x1xf32, #tpu.memory_space<vmem>>, vector<16x1xf32>
    %66 = vector.broadcast %65 : vector<16x1xf32> to vector<16x256xf32>
    %67 = arith.addf %64, %66 : vector<16x256xf32>
    %cst_23 = arith.constant 0.000000e+00 : f32
    %68 = vector.broadcast %cst_23 : f32 to vector<16x256xf32>
    %69 = arith.maximumf %67, %68 : vector<16x256xf32>
    %70 = vector.extract_strided_slice %69 {offsets = [0, 0], sizes = [16, 13], strides = [1, 1]} : vector<16x256xf32> to vector<16x13xf32>
    %c0_24 = arith.constant 0 : index
    %c0_25 = arith.constant 0 : index
    %c0_26 = arith.constant 0 : index
    %c0_27 = arith.constant 0 : index
    %71 = vector.load %arg10[%c0_24, %c0_25, %c0_26, %c0_27] : memref<1x16x13x13xf32, #tpu.memory_space<vmem>>, vector<1x16x1x13xf32>
    %72 = vector.shape_cast %71 : vector<1x16x1x13xf32> to vector<16x13xf32>
    %73 = vector.shape_cast %70 : vector<16x13xf32> to vector<1x16x1x13xf32>
    tpu.vector_store %arg10[%c0_24, %c0_25, %c0_26, %c0_27], %73 {strides = array<i32>} : memref<1x16x13x13xf32, #tpu.memory_space<vmem>>, vector<1x16x1x13xf32>,
    %74 = vector.extract_strided_slice %69 {offsets = [0, 16], sizes = [16, 13], strides = [1, 1]} : vector<16x256xf32> to vector<16x13xf32>
    %c0_28 = arith.constant 0 : index
    %c0_29 = arith.constant 0 : index
    %c1 = arith.constant 1 : index
    %c0_30 = arith.constant 0 : index
    %75 = vector.load %arg10[%c0_28, %c0_29, %c1, %c0_30] : memref<1x16x13x13xf32, #tpu.memory_space<vmem>>, vector<1x16x1x13xf32>
    %76 = vector.shape_cast %75 : vector<1x16x1x13xf32> to vector<16x13xf32>
    %77 = vector.shape_cast %74 : vector<16x13xf32> to vector<1x16x1x13xf32>
    tpu.vector_store %arg10[%c0_28, %c0_29, %c1, %c0_30], %77 {strides = array<i32>} : memref<1x16x13x13xf32, #tpu.memory_space<vmem>>, vector<1x16x1x13xf32>,
    %78 = vector.extract_strided_slice %69 {offsets = [0, 32], sizes = [16, 13], strides = [1, 1]} : vector<16x256xf32> to vector<16x13xf32>
    %c0_31 = arith.constant 0 : index
    %c0_32 = arith.constant 0 : index
    %c2 = arith.constant 2 : index
    %c0_33 = arith.constant 0 : index
    %79 = vector.load %arg10[%c0_31, %c0_32, %c2, %c0_33] : memref<1x16x13x13xf32, #tpu.memory_space<vmem>>, vector<1x16x1x13xf32>
    %80 = vector.shape_cast %79 : vector<1x16x1x13xf32> to vector<16x13xf32>
    %81 = vector.shape_cast %78 : vector<16x13xf32> to vector<1x16x1x13xf32>
    tpu.vector_store %arg10[%c0_31, %c0_32, %c2, %c0_33], %81 {strides = array<i32>} : memref<1x16x13x13xf32, #tpu.memory_space<vmem>>, vector<1x16x1x13xf32>,
    %82 = vector.extract_strided_slice %69 {offsets = [0, 48], sizes = [16, 13], strides = [1, 1]} : vector<16x256xf32> to vector<16x13xf32>
    %c0_34 = arith.constant 0 : index
    %c0_35 = arith.constant 0 : index
    %c3 = arith.constant 3 : index
    %c0_36 = arith.constant 0 : index
    %83 = vector.load %arg10[%c0_34, %c0_35, %c3, %c0_36] : memref<1x16x13x13xf32, #tpu.memory_space<vmem>>, vector<1x16x1x13xf32>
    %84 = vector.shape_cast %83 : vector<1x16x1x13xf32> to vector<16x13xf32>
    %85 = vector.shape_cast %82 : vector<16x13xf32> to vector<1x16x1x13xf32>
    tpu.vector_store %arg10[%c0_34, %c0_35, %c3, %c0_36], %85 {strides = array<i32>} : memref<1x16x13x13xf32, #tpu.memory_space<vmem>>, vector<1x16x1x13xf32>,
    %86 = vector.extract_strided_slice %69 {offsets = [0, 64], sizes = [16, 13], strides = [1, 1]} : vector<16x256xf32> to vector<16x13xf32>
    %c0_37 = arith.constant 0 : index
    %c0_38 = arith.constant 0 : index
    %c4 = arith.constant 4 : index
    %c0_39 = arith.constant 0 : index
    %87 = vector.load %arg10[%c0_37, %c0_38, %c4, %c0_39] : memref<1x16x13x13xf32, #tpu.memory_space<vmem>>, vector<1x16x1x13xf32>
    %88 = vector.shape_cast %87 : vector<1x16x1x13xf32> to vector<16x13xf32>
    %89 = vector.shape_cast %86 : vector<16x13xf32> to vector<1x16x1x13xf32>
    tpu.vector_store %arg10[%c0_37, %c0_38, %c4, %c0_39], %89 {strides = array<i32>} : memref<1x16x13x13xf32, #tpu.memory_space<vmem>>, vector<1x16x1x13xf32>,
    %90 = vector.extract_strided_slice %69 {offsets = [0, 80], sizes = [16, 13], strides = [1, 1]} : vector<16x256xf32> to vector<16x13xf32>
    %c0_40 = arith.constant 0 : index
    %c0_41 = arith.constant 0 : index
    %c5 = arith.constant 5 : index
    %c0_42 = arith.constant 0 : index
    %91 = vector.load %arg10[%c0_40, %c0_41, %c5, %c0_42] : memref<1x16x13x13xf32, #tpu.memory_space<vmem>>, vector<1x16x1x13xf32>
    %92 = vector.shape_cast %91 : vector<1x16x1x13xf32> to vector<16x13xf32>
    %93 = vector.shape_cast %90 : vector<16x13xf32> to vector<1x16x1x13xf32>
    tpu.vector_store %arg10[%c0_40, %c0_41, %c5, %c0_42], %93 {strides = array<i32>} : memref<1x16x13x13xf32, #tpu.memory_space<vmem>>, vector<1x16x1x13xf32>,
    %94 = vector.extract_strided_slice %69 {offsets = [0, 96], sizes = [16, 13], strides = [1, 1]} : vector<16x256xf32> to vector<16x13xf32>
    %c0_43 = arith.constant 0 : index
    %c0_44 = arith.constant 0 : index
    %c6 = arith.constant 6 : index
    %c0_45 = arith.constant 0 : index
    %95 = vector.load %arg10[%c0_43, %c0_44, %c6, %c0_45] : memref<1x16x13x13xf32, #tpu.memory_space<vmem>>, vector<1x16x1x13xf32>
    %96 = vector.shape_cast %95 : vector<1x16x1x13xf32> to vector<16x13xf32>
    %97 = vector.shape_cast %94 : vector<16x13xf32> to vector<1x16x1x13xf32>
    tpu.vector_store %arg10[%c0_43, %c0_44, %c6, %c0_45], %97 {strides = array<i32>} : memref<1x16x13x13xf32, #tpu.memory_space<vmem>>, vector<1x16x1x13xf32>,
    %98 = vector.extract_strided_slice %69 {offsets = [0, 112], sizes = [16, 13], strides = [1, 1]} : vector<16x256xf32> to vector<16x13xf32>
    %c0_46 = arith.constant 0 : index
    %c0_47 = arith.constant 0 : index
    %c7 = arith.constant 7 : index
    %c0_48 = arith.constant 0 : index
    %99 = vector.load %arg10[%c0_46, %c0_47, %c7, %c0_48] : memref<1x16x13x13xf32, #tpu.memory_space<vmem>>, vector<1x16x1x13xf32>
    %100 = vector.shape_cast %99 : vector<1x16x1x13xf32> to vector<16x13xf32>
    %101 = vector.shape_cast %98 : vector<16x13xf32> to vector<1x16x1x13xf32>
    tpu.vector_store %arg10[%c0_46, %c0_47, %c7, %c0_48], %101 {strides = array<i32>} : memref<1x16x13x13xf32, #tpu.memory_space<vmem>>, vector<1x16x1x13xf32>,
    %102 = vector.extract_strided_slice %69 {offsets = [0, 128], sizes = [16, 13], strides = [1, 1]} : vector<16x256xf32> to vector<16x13xf32>
    %c0_49 = arith.constant 0 : index
    %c0_50 = arith.constant 0 : index
    %c8 = arith.constant 8 : index
    %c0_51 = arith.constant 0 : index
    %103 = vector.load %arg10[%c0_49, %c0_50, %c8, %c0_51] : memref<1x16x13x13xf32, #tpu.memory_space<vmem>>, vector<1x16x1x13xf32>
    %104 = vector.shape_cast %103 : vector<1x16x1x13xf32> to vector<16x13xf32>
    %105 = vector.shape_cast %102 : vector<16x13xf32> to vector<1x16x1x13xf32>
    tpu.vector_store %arg10[%c0_49, %c0_50, %c8, %c0_51], %105 {strides = array<i32>} : memref<1x16x13x13xf32, #tpu.memory_space<vmem>>, vector<1x16x1x13xf32>,
    %106 = vector.extract_strided_slice %69 {offsets = [0, 144], sizes = [16, 13], strides = [1, 1]} : vector<16x256xf32> to vector<16x13xf32>
    %c0_52 = arith.constant 0 : index
    %c0_53 = arith.constant 0 : index
    %c9 = arith.constant 9 : index
    %c0_54 = arith.constant 0 : index
    %107 = vector.load %arg10[%c0_52, %c0_53, %c9, %c0_54] : memref<1x16x13x13xf32, #tpu.memory_space<vmem>>, vector<1x16x1x13xf32>
    %108 = vector.shape_cast %107 : vector<1x16x1x13xf32> to vector<16x13xf32>
    %109 = vector.shape_cast %106 : vector<16x13xf32> to vector<1x16x1x13xf32>
    tpu.vector_store %arg10[%c0_52, %c0_53, %c9, %c0_54], %109 {strides = array<i32>} : memref<1x16x13x13xf32, #tpu.memory_space<vmem>>, vector<1x16x1x13xf32>,
    %110 = vector.extract_strided_slice %69 {offsets = [0, 160], sizes = [16, 13], strides = [1, 1]} : vector<16x256xf32> to vector<16x13xf32>
    %c0_55 = arith.constant 0 : index
    %c0_56 = arith.constant 0 : index
    %c10 = arith.constant 10 : index
    %c0_57 = arith.constant 0 : index
    %111 = vector.load %arg10[%c0_55, %c0_56, %c10, %c0_57] : memref<1x16x13x13xf32, #tpu.memory_space<vmem>>, vector<1x16x1x13xf32>
    %112 = vector.shape_cast %111 : vector<1x16x1x13xf32> to vector<16x13xf32>
    %113 = vector.shape_cast %110 : vector<16x13xf32> to vector<1x16x1x13xf32>
    tpu.vector_store %arg10[%c0_55, %c0_56, %c10, %c0_57], %113 {strides = array<i32>} : memref<1x16x13x13xf32, #tpu.memory_space<vmem>>, vector<1x16x1x13xf32>,
    %114 = vector.extract_strided_slice %69 {offsets = [0, 176], sizes = [16, 13], strides = [1, 1]} : vector<16x256xf32> to vector<16x13xf32>
    %c0_58 = arith.constant 0 : index
    %c0_59 = arith.constant 0 : index
    %c11 = arith.constant 11 : index
    %c0_60 = arith.constant 0 : index
    %115 = vector.load %arg10[%c0_58, %c0_59, %c11, %c0_60] : memref<1x16x13x13xf32, #tpu.memory_space<vmem>>, vector<1x16x1x13xf32>
    %116 = vector.shape_cast %115 : vector<1x16x1x13xf32> to vector<16x13xf32>
    %117 = vector.shape_cast %114 : vector<16x13xf32> to vector<1x16x1x13xf32>
    tpu.vector_store %arg10[%c0_58, %c0_59, %c11, %c0_60], %117 {strides = array<i32>} : memref<1x16x13x13xf32, #tpu.memory_space<vmem>>, vector<1x16x1x13xf32>,
    %118 = vector.extract_strided_slice %69 {offsets = [0, 192], sizes = [16, 13], strides = [1, 1]} : vector<16x256xf32> to vector<16x13xf32>
    %c0_61 = arith.constant 0 : index
    %c0_62 = arith.constant 0 : index
    %c12 = arith.constant 12 : index
    %c0_63 = arith.constant 0 : index
    %119 = vector.load %arg10[%c0_61, %c0_62, %c12, %c0_63] : memref<1x16x13x13xf32, #tpu.memory_space<vmem>>, vector<1x16x1x13xf32>
    %120 = vector.shape_cast %119 : vector<1x16x1x13xf32> to vector<16x13xf32>
    %121 = vector.shape_cast %118 : vector<16x13xf32> to vector<1x16x1x13xf32>
    tpu.vector_store %arg10[%c0_61, %c0_62, %c12, %c0_63], %121 {strides = array<i32>} : memref<1x16x13x13xf32, #tpu.memory_space<vmem>>, vector<1x16x1x13xf32>,
    return
  }
  func.func @transform_0(%arg0: i32) -> (i32, i32, i32) {
    %c0_i32 = arith.constant 0 : i32
    %c0_i32_0 = arith.constant 0 : i32
    %c0_i32_1 = arith.constant 0 : i32
    return %arg0, %c0_i32, %c0_i32_0 : i32, i32, i32
  }
  func.func @transform_1(%arg0: i32) -> (i32, i32) {
    %c0_i32 = arith.constant 0 : i32
    %c0_i32_0 = arith.constant 0 : i32
    %c0_i32_1 = arith.constant 0 : i32
    return %c0_i32, %c0_i32_0 : i32, i32
  }
  func.func @transform_2(%arg0: i32) -> (i32, i32) {
    %c0_i32 = arith.constant 0 : i32
    %c0_i32_0 = arith.constant 0 : i32
    %c0_i32_1 = arith.constant 0 : i32
    return %c0_i32, %c0_i32_0 : i32, i32
  }
  func.func @transform_3(%arg0: i32) -> (i32, i32) {
    %c0_i32 = arith.constant 0 : i32
    %c0_i32_0 = arith.constant 0 : i32
    %c0_i32_1 = arith.constant 0 : i32
    return %c0_i32, %c0_i32_0 : i32, i32
  }
  func.func @transform_4(%arg0: i32) -> (i32, i32) {
    %c0_i32 = arith.constant 0 : i32
    %c0_i32_0 = arith.constant 0 : i32
    %c0_i32_1 = arith.constant 0 : i32
    return %c0_i32, %c0_i32_0 : i32, i32
  }
  func.func @transform_5(%arg0: i32) -> (i32, i32) {
    %c0_i32 = arith.constant 0 : i32
    %c0_i32_0 = arith.constant 0 : i32
    %c0_i32_1 = arith.constant 0 : i32
    return %c0_i32, %c0_i32_0 : i32, i32
  }
  func.func @transform_6(%arg0: i32) -> (i32, i32) {
    %c0_i32 = arith.constant 0 : i32
    %c0_i32_0 = arith.constant 0 : i32
    %c0_i32_1 = arith.constant 0 : i32
    return %c0_i32, %c0_i32_0 : i32, i32
  }
  func.func @transform_7(%arg0: i32) -> (i32, i32) {
    %c0_i32 = arith.constant 0 : i32
    %c0_i32_0 = arith.constant 0 : i32
    %c0_i32_1 = arith.constant 0 : i32
    return %c0_i32, %c0_i32_0 : i32, i32
  }
  func.func @transform_8(%arg0: i32) -> (i32, i32) {
    %c0_i32 = arith.constant 0 : i32
    %c0_i32_0 = arith.constant 0 : i32
    %c0_i32_1 = arith.constant 0 : i32
    return %c0_i32, %c0_i32_0 : i32, i32
  }
  func.func @transform_9(%arg0: i32) -> (i32, i32, i32, i32) {
    %c0_i32 = arith.constant 0 : i32
    %c0_i32_0 = arith.constant 0 : i32
    %c0_i32_1 = arith.constant 0 : i32
    %c0_i32_2 = arith.constant 0 : i32
    return %arg0, %c0_i32, %c0_i32_0, %c0_i32_1 : i32, i32, i32, i32
  }
}

</mosaic_0001>

<llo_original>
// kernel: net_conv2d_3_forward.1
$region0: #{net_conv2d_3_forward.1}
  #allocation0 [shape = 'u32[]', space=smem, size = 0x4, offset = 0x4, fixed_abs, tag = 'smem constant byte address 0x4 - core index']
  #allocation1 [shape = 'u32[144,128]{1,0:T(1,128)}', space=vmem, size = 0x12000, scoped, tag = 'internal scratch']
  %s0 = inlined_call_operand.vmem [shape: f32[2,2,256], index: 0, kind: input, shape index: {}]
  %s1 = inlined_call_operand.vmem [shape: f32[4,2], index: 1, kind: input, shape index: {}]
  %s2 = inlined_call_operand.vmem [shape: f32[4,1], index: 2, kind: input, shape index: {}]
  %s3 = inlined_call_operand.vmem [shape: f32[8,16], index: 3, kind: input, shape index: {}]
  %s4 = inlined_call_operand.vmem [shape: f32[8,1], index: 4, kind: input, shape index: {}]
  %s5 = inlined_call_operand.vmem [shape: f32[8,32], index: 5, kind: input, shape index: {}]
  %s6 = inlined_call_operand.vmem [shape: f32[8,1], index: 6, kind: input, shape index: {}]
  %s7 = inlined_call_operand.vmem [shape: f32[16,32], index: 7, kind: input, shape index: {}]
  %s8 = inlined_call_operand.vmem [shape: f32[16,1], index: 8, kind: input, shape index: {}]
  %s9 = inlined_call_operand.vmem [shape: f32[2,16,13,13], index: 9, kind: output, shape index: {}]
  %s10 = sld [smem:[#allocation0]]
  $region69: #{net_conv2d_3_forward.1} parent=0
    _
  %s12 = ssub.s32 1, %s10
  %s13 = scalar_select 0, %s12, %s10
  loop: start=0, step=1, limit=4
  $region2: #{net_conv2d_3_forward.1} parent=0 // loop_pre_header
    _
  $region3: #{net_conv2d_3_forward.1} parent=0 // loop_header
    %s15 = sphi 0, %s19
    %p16 = scmp.ge.s32.totalorder %s15, 4
    %s25 = sphi 0, %s27
    %s28 = sphi 0, %s25
    %s29 = sphi 0, %s28
    %s45 = sphi 0, %s29
    %s49 = sphi 0, %s49
    %s51 = sphi 0, %s49
    %s52 = sphi 0, %s51
    %s66 = sphi 0, %s52
    %s70 = sphi 0, %s70
    %s72 = sphi 0, %s70
    %s73 = sphi 0, %s72
    %s87 = sphi 0, %s73
    %s91 = sphi 0, %s91
    %s93 = sphi 0, %s91
    %s94 = sphi 0, %s93
    %s108 = sphi 0, %s94
    %s112 = sphi 0, %s112
    %s114 = sphi 0, %s112
    %s115 = sphi 0, %s114
    %s129 = sphi 0, %s115
    %s133 = sphi 0, %s133
    %s135 = sphi 0, %s133
    %s136 = sphi 0, %s135
    %s150 = sphi 0, %s136
    %s154 = sphi 0, %s154
    %s156 = sphi 0, %s154
    %s157 = sphi 0, %s156
    %s171 = sphi 0, %s157
    %s175 = sphi 0, %s175
    %s177 = sphi 0, %s175
    %s178 = sphi 0, %s177
    %s192 = sphi 0, %s178
    %s196 = sphi 0, %s196
    %s198 = sphi 0, %s196
    %s199 = sphi 0, %s198
    %s213 = sphi 0, %s199
    %s219 = sphi 0, %s221
    %s222 = sphi 0, %s219
    %s223 = sphi 0, %s222
    %s239 = sphi 0, %s223
  $region4: #{net_conv2d_3_forward.1} parent=0 // loop_header_branch
    %18 = sbr.rel (%p16) target = $region8
  $region5: #{net_conv2d_3_forward.1} parent=0 // loop_body
    %s20 = ssub.s32 %s15, 1
    %s21 = ssub.s32 %s15, 2
    %s22 = sadd.s32 %s15, 1
    %s23 = ssub.s32 %s15, %s22
    %p24 = scmp.eq.s32.totalorder %s23, 0
    %s26 = sadd.s32 %s25, 1
    %s27 = scalar_select %p24, %s25, %s26
    %p30 = pneg %p24
    %p31 = scmp.eq.s32.totalorder %s15, 1
    %p32 = por %p30, %p31
    %p33 = scmp.ne.s32.totalorder %s25, %s28
    %p34 = scmp.eq.s32.totalorder %s15, 0
    %p35 = por %p33, %p34
    %p36 = scmp.ne.s32.totalorder %s25, %s28
    %p37 = scmp.eq.s32.totalorder %s20, 1
    %p38 = por %p36, %p37
    %p39 = scmp.ne.s32.totalorder %s28, %s29
    %p40 = scmp.eq.s32.totalorder %s20, 0
    %p41 = por %p39, %p40
    %p42 = scmp.ne.s32.totalorder %s28, %s29
    %p43 = scmp.eq.s32.totalorder %s21, 1
    %p44 = por %p42, %p43
    %p46 = scmp.ne.s32.totalorder %s29, %s45
    %p47 = scmp.eq.s32.totalorder %s21, 0
    %p48 = por %p46, %p47
    %s50 = sadd.s32 %s49, 1
    %p53 = scmp.eq.s32.totalorder %s15, 1
    %p54 = scmp.ne.s32.totalorder %s49, %s51
    %p55 = scmp.eq.s32.totalorder %s15, 0
    %p56 = por %p54, %p55
    %p57 = scmp.ne.s32.totalorder %s49, %s51
    %p58 = scmp.eq.s32.totalorder %s20, 1
    %p59 = por %p57, %p58
    %p60 = scmp.ne.s32.totalorder %s51, %s52
    %p61 = scmp.eq.s32.totalorder %s20, 0
    %p62 = por %p60, %p61
    %p63 = scmp.ne.s32.totalorder %s51, %s52
    %p64 = scmp.eq.s32.totalorder %s21, 1
    %p65 = por %p63, %p64
    %p67 = scmp.ne.s32.totalorder %s52, %s66
    %p68 = scmp.eq.s32.totalorder %s21, 0
    %p69 = por %p67, %p68
    %s71 = sadd.s32 %s70, 1
    %p74 = scmp.eq.s32.totalorder %s15, 1
    %p75 = scmp.ne.s32.totalorder %s70, %s72
    %p76 = scmp.eq.s32.totalorder %s15, 0
    %p77 = por %p75, %p76
    %p78 = scmp.ne.s32.totalorder %s70, %s72
    %p79 = scmp.eq.s32.totalorder %s20, 1
    %p80 = por %p78, %p79
    %p81 = scmp.ne.s32.totalorder %s72, %s73
    %p82 = scmp.eq.s32.totalorder %s20, 0
    %p83 = por %p81, %p82
    %p84 = scmp.ne.s32.totalorder %s72, %s73
    %p85 = scmp.eq.s32.totalorder %s21, 1
    %p86 = por %p84, %p85
    %p88 = scmp.ne.s32.totalorder %s73, %s87
    %p89 = scmp.eq.s32.totalorder %s21, 0
    %p90 = por %p88, %p89
    %s92 = sadd.s32 %s91, 1
    %p95 = scmp.eq.s32.totalorder %s15, 1
    %p96 = scmp.ne.s32.totalorder %s91, %s93
    %p97 = scmp.eq.s32.totalorder %s15, 0
    %p98 = por %p96, %p97
    %p99 = scmp.ne.s32.totalorder %s91, %s93
    %p100 = scmp.eq.s32.totalorder %s20, 1
    %p101 = por %p99, %p100
    %p102 = scmp.ne.s32.totalorder %s93, %s94
    %p103 = scmp.eq.s32.totalorder %s20, 0
    %p104 = por %p102, %p103
    %p105 = scmp.ne.s32.totalorder %s93, %s94
    %p106 = scmp.eq.s32.totalorder %s21, 1
    %p107 = por %p105, %p106
    %p109 = scmp.ne.s32.totalorder %s94, %s108
    %p110 = scmp.eq.s32.totalorder %s21, 0
    %p111 = por %p109, %p110
    %s113 = sadd.s32 %s112, 1
    %p116 = scmp.eq.s32.totalorder %s15, 1
    %p117 = scmp.ne.s32.totalorder %s112, %s114
    %p118 = scmp.eq.s32.totalorder %s15, 0
    %p119 = por %p117, %p118
    %p120 = scmp.ne.s32.totalorder %s112, %s114
    %p121 = scmp.eq.s32.totalorder %s20, 1
    %p122 = por %p120, %p121
    %p123 = scmp.ne.s32.totalorder %s114, %s115
    %p124 = scmp.eq.s32.totalorder %s20, 0
    %p125 = por %p123, %p124
    %p126 = scmp.ne.s32.totalorder %s114, %s115
    %p127 = scmp.eq.s32.totalorder %s21, 1
    %p128 = por %p126, %p127
    %p130 = scmp.ne.s32.totalorder %s115, %s129
    %p131 = scmp.eq.s32.totalorder %s21, 0
    %p132 = por %p130, %p131
    %s134 = sadd.s32 %s133, 1
    %p137 = scmp.eq.s32.totalorder %s15, 1
    %p138 = scmp.ne.s32.totalorder %s133, %s135
    %p139 = scmp.eq.s32.totalorder %s15, 0
    %p140 = por %p138, %p139
    %p141 = scmp.ne.s32.totalorder %s133, %s135
    %p142 = scmp.eq.s32.totalorder %s20, 1
    %p143 = por %p141, %p142
    %p144 = scmp.ne.s32.totalorder %s135, %s136
    %p145 = scmp.eq.s32.totalorder %s20, 0
    %p146 = por %p144, %p145
    %p147 = scmp.ne.s32.totalorder %s135, %s136
    %p148 = scmp.eq.s32.totalorder %s21, 1
    %p149 = por %p147, %p148
    %p151 = scmp.ne.s32.totalorder %s136, %s150
    %p152 = scmp.eq.s32.totalorder %s21, 0
    %p153 = por %p151, %p152
    %s155 = sadd.s32 %s154, 1
    %p158 = scmp.eq.s32.totalorder %s15, 1
    %p159 = scmp.ne.s32.totalorder %s154, %s156
    %p160 = scmp.eq.s32.totalorder %s15, 0
    %p161 = por %p159, %p160
    %p162 = scmp.ne.s32.totalorder %s154, %s156
    %p163 = scmp.eq.s32.totalorder %s20, 1
    %p164 = por %p162, %p163
    %p165 = scmp.ne.s32.totalorder %s156, %s157
    %p166 = scmp.eq.s32.totalorder %s20, 0
    %p167 = por %p165, %p166
    %p168 = scmp.ne.s32.totalorder %s156, %s157
    %p169 = scmp.eq.s32.totalorder %s21, 1
    %p170 = por %p168, %p169
    %p172 = scmp.ne.s32.totalorder %s157, %s171
    %p173 = scmp.eq.s32.totalorder %s21, 0
    %p174 = por %p172, %p173
    %s176 = sadd.s32 %s175, 1
    %p179 = scmp.eq.s32.totalorder %s15, 1
    %p180 = scmp.ne.s32.totalorder %s175, %s177
    %p181 = scmp.eq.s32.totalorder %s15, 0
    %p182 = por %p180, %p181
    %p183 = scmp.ne.s32.totalorder %s175, %s177
    %p184 = scmp.eq.s32.totalorder %s20, 1
    %p185 = por %p183, %p184
    %p186 = scmp.ne.s32.totalorder %s177, %s178
    %p187 = scmp.eq.s32.totalorder %s20, 0
    %p188 = por %p186, %p187
    %p189 = scmp.ne.s32.totalorder %s177, %s178
    %p190 = scmp.eq.s32.totalorder %s21, 1
    %p191 = por %p189, %p190
    %p193 = scmp.ne.s32.totalorder %s178, %s192
    %p194 = scmp.eq.s32.totalorder %s21, 0
    %p195 = por %p193, %p194
    %s197 = sadd.s32 %s196, 1
    %p200 = scmp.eq.s32.totalorder %s15, 1
    %p201 = scmp.ne.s32.totalorder %s196, %s198
    %p202 = scmp.eq.s32.totalorder %s15, 0
    %p203 = por %p201, %p202
    %p204 = scmp.ne.s32.totalorder %s196, %s198
    %p205 = scmp.eq.s32.totalorder %s20, 1
    %p206 = por %p204, %p205
    %p207 = scmp.ne.s32.totalorder %s198, %s199
    %p208 = scmp.eq.s32.totalorder %s20, 0
    %p209 = por %p207, %p208
    %p210 = scmp.ne.s32.totalorder %s198, %s199
    %p211 = scmp.eq.s32.totalorder %s21, 1
    %p212 = por %p210, %p211
    %p214 = scmp.ne.s32.totalorder %s199, %s213
    %p215 = scmp.eq.s32.totalorder %s21, 0
    %p216 = por %p214, %p215
    %s217 = ssub.s32 %s15, %s22
    %p218 = scmp.eq.s32.totalorder %s217, 0
    %s220 = sadd.s32 %s219, 1
    %s221 = scalar_select %p218, %s219, %s220
    %p224 = pneg %p218
    %p225 = scmp.eq.s32.totalorder %s15, 1
    %p226 = por %p224, %p225
    %p227 = scmp.ne.s32.totalorder %s219, %s222
    %p228 = scmp.eq.s32.totalorder %s15, 0
    %p229 = por %p227, %p228
    %p230 = scmp.ne.s32.totalorder %s219, %s222
    %p231 = scmp.eq.s32.totalorder %s20, 1
    %p232 = por %p230, %p231
    %p233 = scmp.ne.s32.totalorder %s222, %s223
    %p234 = scmp.eq.s32.totalorder %s20, 0
    %p235 = por %p233, %p234
    %p236 = scmp.ne.s32.totalorder %s222, %s223
    %p237 = scmp.eq.s32.totalorder %s21, 1
    %p238 = por %p236, %p237
    %p240 = scmp.ne.s32.totalorder %s223, %s239
    %p241 = scmp.eq.s32.totalorder %s21, 0
    %p242 = por %p240, %p241
    %p243 = scmp.le.s32.totalorder 1, %s15
    %p244 = scmp.lt.s32.totalorder %s15, 3
    %p245 = pnand %p243, %p244
    %p246 = pneg %p245
    // Predicated region
    $region9: #{net_conv2d_3_forward.1} parent=5 // pred_check
      _
    $region10: #{net_conv2d_3_forward.1} parent=5 // pred_check_branch
      %248 = sbr.rel (%p245) target = $region12
    $region11: #{net_conv2d_3_forward.1} parent=5 // pred_region
      %s249 = ssub.s32 %s15, 1
      // Predicated region
      $region13: #{net_conv2d_3_forward.1} parent=11 // pred_check
        %p250 = pneg %p62
      $region14: #{net_conv2d_3_forward.1} parent=11 // pred_check_branch
        %252 = sbr.rel (%p250) target = $region16
      $region15: #{net_conv2d_3_forward.1} parent=11 // pred_region
        _
      $region16: #{net_conv2d_3_forward.1} parent=11 // pred_fallthru
        _
      // Predicated region
      $region17: #{net_conv2d_3_forward.1} parent=11 // pred_check
        %p253 = pneg %p83
      $region18: #{net_conv2d_3_forward.1} parent=11 // pred_check_branch
        %255 = sbr.rel (%p253) target = $region20
      $region19: #{net_conv2d_3_forward.1} parent=11 // pred_region
        _
      $region20: #{net_conv2d_3_forward.1} parent=11 // pred_fallthru
        _
      // Predicated region
      $region21: #{net_conv2d_3_forward.1} parent=11 // pred_check
        %p256 = pneg %p104
      $region22: #{net_conv2d_3_forward.1} parent=11 // pred_check_branch
        %258 = sbr.rel (%p256) target = $region24
      $region23: #{net_conv2d_3_forward.1} parent=11 // pred_region
        _
      $region24: #{net_conv2d_3_forward.1} parent=11 // pred_fallthru
        _
      // Predicated region
      $region25: #{net_conv2d_3_forward.1} parent=11 // pred_check
        %p259 = pneg %p125
      $region26: #{net_conv2d_3_forward.1} parent=11 // pred_check_branch
        %261 = sbr.rel (%p259) target = $region28
      $region27: #{net_conv2d_3_forward.1} parent=11 // pred_region
        _
      $region28: #{net_conv2d_3_forward.1} parent=11 // pred_fallthru
        _
      // Predicated region
      $region29: #{net_conv2d_3_forward.1} parent=11 // pred_check
        %p262 = pneg %p146
      $region30: #{net_conv2d_3_forward.1} parent=11 // pred_check_branch
        %264 = sbr.rel (%p262) target = $region32
      $region31: #{net_conv2d_3_forward.1} parent=11 // pred_region
        _
      $region32: #{net_conv2d_3_forward.1} parent=11 // pred_fallthru
        _
      // Predicated region
      $region33: #{net_conv2d_3_forward.1} parent=11 // pred_check
        %p265 = pneg %p167
      $region34: #{net_conv2d_3_forward.1} parent=11 // pred_check_branch
        %267 = sbr.rel (%p265) target = $region36
      $region35: #{net_conv2d_3_forward.1} parent=11 // pred_region
        _
      $region36: #{net_conv2d_3_forward.1} parent=11 // pred_fallthru
        _
      // Predicated region
      $region37: #{net_conv2d_3_forward.1} parent=11 // pred_check
        %p268 = pneg %p188
      $region38: #{net_conv2d_3_forward.1} parent=11 // pred_check_branch
        %270 = sbr.rel (%p268) target = $region40
      $region39: #{net_conv2d_3_forward.1} parent=11 // pred_region
        _
      $region40: #{net_conv2d_3_forward.1} parent=11 // pred_fallthru
        _
      // Predicated region
      $region41: #{net_conv2d_3_forward.1} parent=11 // pred_check
        %p271 = pneg %p209
      $region42: #{net_conv2d_3_forward.1} parent=11 // pred_check_branch
        %273 = sbr.rel (%p271) target = $region44
      $region43: #{net_conv2d_3_forward.1} parent=11 // pred_region
        _
      $region44: #{net_conv2d_3_forward.1} parent=11 // pred_fallthru
        _
    $region12: #{net_conv2d_3_forward.1} parent=5 // pred_fallthru
      _
    %p274 = scmp.lt.s32.totalorder %s15, 2
    // Predicated region
    $region45: #{net_conv2d_3_forward.1} parent=5 // pred_check
      %p275 = pneg %p274
    $region46: #{net_conv2d_3_forward.1} parent=5 // pred_check_branch
      %277 = sbr.rel (%p275) target = $region48
    $region47: #{net_conv2d_3_forward.1} parent=5 // pred_region
      // Predicated region
      $region49: #{net_conv2d_3_forward.1} parent=47 // pred_check
        %p278 = pneg %p35
      $region50: #{net_conv2d_3_forward.1} parent=47 // pred_check_branch
        %280 = sbr.rel (%p278) target = $region52
      $region51: #{net_conv2d_3_forward.1} parent=47 // pred_region
        %p281 = scmp.lt.s32.totalorder %s15, 1
        %s282 = scalar_select %p281, %s15, 1
        %s283 = smul.addr %s282, 2
        %s284 = smul.addr %s283, 2
        %s285 = scalar_lea.vmem %s0, %s284
      $region52: #{net_conv2d_3_forward.1} parent=47 // pred_fallthru
        _
    $region48: #{net_conv2d_3_forward.1} parent=5 // pred_fallthru
      _
    %p286 = scmp.le.s32.totalorder 1, %s15
    %p287 = scmp.lt.s32.totalorder %s15, 3
    %p288 = pnand %p286, %p287
    %p289 = pneg %p288
    // Predicated region
    $region53: #{net_conv2d_3_forward.1} parent=5 // pred_check
      _
    $region54: #{net_conv2d_3_forward.1} parent=5 // pred_check_branch
      %291 = sbr.rel (%p288) target = $region56
    $region55: #{net_conv2d_3_forward.1} parent=5 // pred_region
      %s292 = ssub.s32 %s15, 1
      %p293 = scmp.lt.s32.totalorder %s20, 1
      %s294 = scalar_select %p293, %s20, 1
      %s295 = smul.addr %s294, 2
      %s296 = smul.addr %s295, 2
      %s297 = scalar_lea.vmem %s0, %s296
      %p298 = pneg %p41
      %p299 = pneg %p38
      %p300 = pneg %p62
      %p301 = pneg %p59
      %p302 = pneg %p83
      %p303 = pneg %p80
      %p304 = pneg %p104
      %p305 = pneg %p101
      %p306 = pneg %p125
      %p307 = pneg %p122
      %p308 = pneg %p146
      %p309 = pneg %p143
      %p310 = pneg %p167
      %p311 = pneg %p164
      %p312 = pneg %p188
      %p313 = pneg %p185
      %p314 = pneg %p209
      %p315 = pneg %p206
      %p316 = pneg %p235
      %p317 = pneg %p232
      %p318 = scmp.lt.s32.totalorder %s20, 1
      %s319 = scalar_select %p318, %s20, 1
      %s320 = smul.addr %s319, 32
      %s321 = smul.addr %s320, 8
      %s322 = scalar_lea.vmem %s9, %s321
      %p323 = scmp.lt.s32.totalorder %s20, 1
      %s324 = scalar_select %p323, %s20, 1
      %s325 = smul.addr %s324, 2
      %s326 = smul.addr %s325, 2
      %s327 = scalar_lea.vmem %s0, %s326
      %p328 = scmp.lt.s32.totalorder %s20, 1
      %s329 = scalar_select %p328, %s20, 1
      %s330 = smul.addr %s329, 32
      %s331 = smul.addr %s330, 8
      %s332 = scalar_lea.vmem %s9, %s331
      %v333 = vld [vmem:[%s327] sm:$0xf]
      %v334 = vld [vmem:[%s1] sm:$0xf]
      %336 = vset.pattern.permute.xlu0 0
      %337 = vperm.xlu0 %336, %v334
      %v338 = vpop.permute.xlu0 %337
      %v341 = vlaneseq
      %v342 = vshrl.u32 %v341, 7
      %v343 = vsub.s32 0, %v342
      %v344 = vrot.slane %v333, %v343
      %v345 = vlaneseq
      %v346 = vshrl.u32 %v345, 7
      %v347 = vsub.s32 2, %v346
      %v348 = vrot.slane %v333, %v347
      %v351 = vlaneseq
      %v352 = vshrl.u32 %v351, 7
      %v353 = vsub.s32 0, %v352
      %v354 = vrot.slane %v344, %v353
      %v355 = vlaneseq
      %v356 = vshrl.u32 %v355, 7
      %v357 = vsub.s32 0, %v356
      %v358 = vrot.slane %v348, %v357
      %v359 = vmul.f32 %v338, %v354
      %v360 = vmul.f32 %v338, %v358
      %361 = vset.pattern.permute.xlu0 1
      %362 = vperm.xlu0 %361, %v334
      %v363 = vpop.permute.xlu0 %362
      %v365 = vlaneseq
      %v366 = vshrl.u32 %v365, 7
      %v367 = vsub.s32 1, %v366
      %v368 = vrot.slane %v333, %v367
      %v369 = vlaneseq
      %v370 = vshrl.u32 %v369, 7
      %v371 = vsub.s32 3, %v370
      %v372 = vrot.slane %v333, %v371
      %v375 = vlaneseq
      %v376 = vshrl.u32 %v375, 7
      %v377 = vsub.s32 1, %v376
      %v378 = vrot.slane %v368, %v377
      %v379 = vlaneseq
      %v380 = vshrl.u32 %v379, 7
      %v381 = vsub.s32 1, %v380
      %v382 = vrot.slane %v372, %v381
      %v383 = vmul.f32 %v363, %v378
      %v384 = vmul.f32 %v363, %v382
      %v385 = vadd.f32 %v359, %v383
      %v386 = vadd.f32 %v360, %v384
      %v387 = vld [vmem:[%s2] sm:$0xf]
      %389 = vset.pattern.permute.xlu0 0
      %390 = vperm.xlu0 %389, %v387
      %v391 = vpop.permute.xlu0 %390
      %v393 = vadd.f32 %v385, %v391
      %v394 = vadd.f32 %v386, %v391
      %v395 = vmax.f32 %v393, 0.0
      %v396 = vmax.f32 %v394, 0.0
      %399 = vrot.lane.b32.xlu0 %v395, 127
      %v400 = vpop.permute.xlu0 %399
      %401 = vrot.lane.b32.xlu0 %v396, 127
      %v402 = vpop.permute.xlu0 %401
      %vm403 = vcmask 1039360
      %v404 = vsel %vm403, %v400, %v402
      %v407 = vsel %vm403, %v402, %v400
      %408 = vrot.lane.b32.xlu0 %v395, 112
      %v409 = vpop.permute.xlu0 %408
      %410 = vrot.lane.b32.xlu0 %v396, 112
      %v411 = vpop.permute.xlu0 %410
      %vm412 = vcmask 916480
      %v413 = vsel %vm412, %v409, %v411
      %v417 = vsel %vm412, %v411, %v409
      %418 = vrot.lane.b32.xlu0 %v395, 111
      %v419 = vpop.permute.xlu0 %418
      %420 = vrot.lane.b32.xlu0 %v396, 111
      %v421 = vpop.permute.xlu0 %420
      %vm422 = vcmask 908288
      %v423 = vsel %vm422, %v419, %v421
      %v426 = vsel %vm422, %v421, %v419
      %v428 = vrot.slane %v404, 4
      %v429 = vrot.slane %v407, 4
      %v433 = vrot.slane %v423, 4
      %v434 = vrot.slane %v426, 4
      %vm437 = vcmask 1043456
      %v438 = vsel %vm437, %v395, %v428
      %v439 = vsel %vm437, %v396, %v429
      %v440 = vsel %vm437, %v413, %v433
      %v441 = vsel %vm437, %v417, %v434
      %v442 = vld [vmem:[%s3] sm:$0xff]
      %v443 = vld [vmem:[%s4] sm:$0xff]
      %445 = vset.pattern.permute.xlu0 0
      %446 = vperm.xlu0 %445, %v443
      %v447 = vpop.permute.xlu0 %446
      %vm449 = vcmask 130048
      %v451 = vsel %vm449, %v442, 0
      %453 = vmatprep.subr.mxu0 0.0
      %454 = vmatpush1.msra.mxu0 0.0
      %455 = vmatprep.subr.mxu0 0.0
      %456 = vmatpush1.msra.mxu0 0.0
      %457 = vmatprep.subr.mxu0 0.0
      %458 = vmatpush1.msra.mxu0 0.0
      %459 = vmatprep.subr.mxu0 0.0
      %460 = vmatpush1.msra.mxu0 0.0
      %461 = vmatprep.subr.mxu0 0.0
      %462 = vmatpush1.msra.mxu0 0.0
      %463 = vmatprep.subr.mxu0 0.0
      %464 = vmatpush1.msra.mxu0 0.0
      %465 = vmatprep.subr.mxu0 0.0
      %466 = vmatpush1.msra.mxu0 0.0
      %467 = vmatprep.subr.mxu0 0.0
      %468 = vmatpush1.msra.mxu0 0.0
      %469 = vmatprep.subr.mxu0 0.0
      %470 = vmatpush1.msra.mxu0 0.0
      %471 = vmatprep.subr.mxu0 0.0
      %472 = vmatpush1.msra.mxu0 0.0
      %473 = vmatprep.subr.mxu0 0.0
      %474 = vmatpush1.msra.mxu0 0.0
      %475 = vmatprep.subr.mxu0 0.0
      %476 = vmatpush1.msra.mxu0 0.0
      %477 = vmatprep.subr.mxu0 0.0
      %478 = vmatpush1.msra.mxu0 0.0
      %479 = vmatprep.subr.mxu0 0.0
      %480 = vmatpush1.msra.mxu0 0.0
      %481 = vmatprep.subr.mxu0 %v441
      %482 = vmatpush1.msra.mxu0 %v440
      %483 = vmatprep.subr.mxu0 %v439
      %484 = vmatpush1.msra.mxu0 %v438
      %485 = vmatprep.subr.mxu0 0.0
      %486 = vmatpush2.msra.mxu0 0.0
      %487 = vmatprep.subr.mxu0 0.0
      %488 = vmatpush2.msra.mxu0 0.0
      %489 = vmatprep.subr.mxu0 0.0
      %490 = vmatpush2.msra.mxu0 0.0
      %491 = vmatprep.subr.mxu0 0.0
      %492 = vmatpush2.msra.mxu0 0.0
      %493 = vmatprep.subr.mxu0 0.0
      %494 = vmatpush2.msra.mxu0 0.0
      %495 = vmatprep.subr.mxu0 0.0
      %496 = vmatpush2.msra.mxu0 0.0
      %497 = vmatprep.subr.mxu0 0.0
      %498 = vmatpush2.msra.mxu0 0.0
      %499 = vmatprep.subr.mxu0 0.0
      %500 = vmatpush2.msra.mxu0 0.0
      %501 = vmatprep.subr.mxu0 0.0
      %502 = vmatpush2.msra.mxu0 0.0
      %503 = vmatprep.subr.mxu0 0.0
      %504 = vmatpush2.msra.mxu0 0.0
      %505 = vmatprep.subr.mxu0 0.0
      %506 = vmatpush2.msra.mxu0 0.0
      %507 = vmatprep.subr.mxu0 0.0
      %508 = vmatpush2.msra.mxu0 0.0
      %509 = vmatprep.subr.mxu0 0.0
      %510 = vmatpush2.msra.mxu0 0.0
      %511 = vmatprep.subr.mxu0 0.0
      %512 = vmatpush2.msra.mxu0 0.0
      %513 = vmatprep.subr.mxu0 0.0
      %514 = vmatpush2.msra.mxu0 0.0
      %515 = vmatprep.subr.mxu0 0.0
      %516 = vmatpush2.msra.mxu0 0.0
      %517 = vmatprep.mubr.f32.mxu0 0.0
      %518 = vmatmul.mubr.f32.gmra.mxu0 %v451
      %v519 = vpop.f32.mrf.mxu0
      %v520 = vadd.f32 %v447, %v519
      %v521 = vpop.f32.mrf.mxu0
      %v522 = vadd.f32 %v447, %v521
      %523 = vdwg.mxu0
      %v524 = vmax.f32 %v520, 0.0
      %v525 = vmax.f32 %v522, 0.0
      %528 = vrot.lane.b32.xlu0 %v524, 127
      %v529 = vpop.permute.xlu0 %528
      %530 = vrot.lane.b32.xlu0 %v525, 127
      %v531 = vpop.permute.xlu0 %530
      %v532 = vsel %vm403, %v529, %v531
      %v536 = vsel %vm403, %v531, %v529
      %537 = vrot.lane.b32.xlu0 %v524, 112
      %v538 = vpop.permute.xlu0 %537
      %539 = vrot.lane.b32.xlu0 %v525, 112
      %v540 = vpop.permute.xlu0 %539
      %v541 = vsel %vm412, %v538, %v540
      %v545 = vsel %vm412, %v540, %v538
      %546 = vrot.lane.b32.xlu0 %v524, 111
      %v547 = vpop.permute.xlu0 %546
      %548 = vrot.lane.b32.xlu0 %v525, 111
      %v549 = vpop.permute.xlu0 %548
      %v550 = vsel %vm422, %v547, %v549
      %v554 = vsel %vm422, %v549, %v547
      %v555 = vld [vmem:[%s5] sm:$0xff]
      %v556 = vld [vmem:[%s6] sm:$0xff]
      %558 = vset.pattern.permute.xlu0 0
      %559 = vperm.xlu0 %558, %v556
      %v560 = vpop.permute.xlu0 %559
      %vm562 = vcmask 261120
      %v564 = vsel %vm562, %v555, 0
      %566 = vmatprep.subr.mxu0 0.0
      %567 = vmatpush1.msra.mxu0 0.0
      %568 = vmatprep.subr.mxu0 0.0
      %569 = vmatpush1.msra.mxu0 0.0
      %570 = vmatprep.subr.mxu0 0.0
      %571 = vmatpush1.msra.mxu0 0.0
      %572 = vmatprep.subr.mxu0 0.0
      %573 = vmatpush1.msra.mxu0 0.0
      %574 = vmatprep.subr.mxu0 0.0
      %575 = vmatpush1.msra.mxu0 0.0
      %576 = vmatprep.subr.mxu0 0.0
      %577 = vmatpush1.msra.mxu0 0.0
      %578 = vmatprep.subr.mxu0 0.0
      %579 = vmatpush1.msra.mxu0 0.0
      %580 = vmatprep.subr.mxu0 0.0
      %581 = vmatpush1.msra.mxu0 0.0
      %582 = vmatprep.subr.mxu0 0.0
      %583 = vmatpush1.msra.mxu0 0.0
      %584 = vmatprep.subr.mxu0 0.0
      %585 = vmatpush1.msra.mxu0 0.0
      %586 = vmatprep.subr.mxu0 0.0
      %587 = vmatpush1.msra.mxu0 0.0
      %588 = vmatprep.subr.mxu0 0.0
      %589 = vmatpush1.msra.mxu0 0.0
      %590 = vmatprep.subr.mxu0 %v554
      %591 = vmatpush1.msra.mxu0 %v550
      %592 = vmatprep.subr.mxu0 %v545
      %593 = vmatpush1.msra.mxu0 %v541
      %594 = vmatprep.subr.mxu0 %v536
      %595 = vmatpush1.msra.mxu0 %v532
      %596 = vmatprep.subr.mxu0 %v525
      %597 = vmatpush1.msra.mxu0 %v524
      %598 = vmatprep.subr.mxu0 0.0
      %599 = vmatpush2.msra.mxu0 0.0
      %600 = vmatprep.subr.mxu0 0.0
      %601 = vmatpush2.msra.mxu0 0.0
      %602 = vmatprep.subr.mxu0 0.0
      %603 = vmatpush2.msra.mxu0 0.0
      %604 = vmatprep.subr.mxu0 0.0
      %605 = vmatpush2.msra.mxu0 0.0
      %606 = vmatprep.subr.mxu0 0.0
      %607 = vmatpush2.msra.mxu0 0.0
      %608 = vmatprep.subr.mxu0 0.0
      %609 = vmatpush2.msra.mxu0 0.0
      %610 = vmatprep.subr.mxu0 0.0
      %611 = vmatpush2.msra.mxu0 0.0
      %612 = vmatprep.subr.mxu0 0.0
      %613 = vmatpush2.msra.mxu0 0.0
      %614 = vmatprep.subr.mxu0 0.0
      %615 = vmatpush2.msra.mxu0 0.0
      %616 = vmatprep.subr.mxu0 0.0
      %617 = vmatpush2.msra.mxu0 0.0
      %618 = vmatprep.subr.mxu0 0.0
      %619 = vmatpush2.msra.mxu0 0.0
      %620 = vmatprep.subr.mxu0 0.0
      %621 = vmatpush2.msra.mxu0 0.0
      %622 = vmatprep.subr.mxu0 0.0
      %623 = vmatpush2.msra.mxu0 0.0
      %624 = vmatprep.subr.mxu0 0.0
      %625 = vmatpush2.msra.mxu0 0.0
      %626 = vmatprep.subr.mxu0 0.0
      %627 = vmatpush2.msra.mxu0 0.0
      %628 = vmatprep.subr.mxu0 0.0
      %629 = vmatpush2.msra.mxu0 0.0
      %630 = vmatprep.mubr.f32.mxu0 0.0
      %631 = vmatmul.mubr.f32.gmra.mxu0 %v564
      %v632 = vpop.f32.mrf.mxu0
      %v633 = vadd.f32 %v560, %v632
      %v634 = vpop.f32.mrf.mxu0
      %v635 = vadd.f32 %v560, %v634
      %636 = vdwg.mxu0
      %v637 = vmax.f32 %v633, 0.0
      %v638 = vmax.f32 %v635, 0.0
      %641 = vrot.lane.b32.xlu0 %v637, 127
      %v642 = vpop.permute.xlu0 %641
      %643 = vrot.lane.b32.xlu0 %v638, 127
      %v644 = vpop.permute.xlu0 %643
      %v645 = vsel %vm403, %v642, %v644
      %v649 = vsel %vm403, %v644, %v642
      %650 = vrot.lane.b32.xlu0 %v637, 112
      %v651 = vpop.permute.xlu0 %650
      %652 = vrot.lane.b32.xlu0 %v638, 112
      %v653 = vpop.permute.xlu0 %652
      %v654 = vsel %vm412, %v651, %v653
      %v658 = vsel %vm412, %v653, %v651
      %659 = vrot.lane.b32.xlu0 %v637, 111
      %v660 = vpop.permute.xlu0 %659
      %661 = vrot.lane.b32.xlu0 %v638, 111
      %v662 = vpop.permute.xlu0 %661
      %v663 = vsel %vm422, %v660, %v662
      %v667 = vsel %vm422, %v662, %v660
      %v668 = vld [vmem:[%s7] sm:$0xff]
      %v669 = vld [vmem:[%s7 + $0x8] sm:$0xff]
      %v670 = vld [vmem:[%s8] sm:$0xff]
      %v671 = vld [vmem:[%s8 + $0x8] sm:$0xff]
      %673 = vset.pattern.permute.xlu0 0
      %674 = vperm.xlu0 %673, %v670
      %v675 = vpop.permute.xlu0 %674
      %678 = vset.pattern.permute.xlu0 0
      %679 = vperm.xlu0 %678, %v671
      %v680 = vpop.permute.xlu0 %679
      %v683 = vsel %vm562, %v668, 0
      %v686 = vsel %vm562, %v669, 0
      %688 = vmatprep.subr.mxu0 0.0
      %689 = vmatpush1.msra.mxu0 0.0
      %690 = vmatprep.subr.mxu0 0.0
      %691 = vmatpush1.msra.mxu0 0.0
      %692 = vmatprep.subr.mxu0 0.0
      %693 = vmatpush1.msra.mxu0 0.0
      %694 = vmatprep.subr.mxu0 0.0
      %695 = vmatpush1.msra.mxu0 0.0
      %696 = vmatprep.subr.mxu0 0.0
      %697 = vmatpush1.msra.mxu0 0.0
      %698 = vmatprep.subr.mxu0 0.0
      %699 = vmatpush1.msra.mxu0 0.0
      %700 = vmatprep.subr.mxu0 0.0
      %701 = vmatpush1.msra.mxu0 0.0
      %702 = vmatprep.subr.mxu0 0.0
      %703 = vmatpush1.msra.mxu0 0.0
      %704 = vmatprep.subr.mxu0 0.0
      %705 = vmatpush1.msra.mxu0 0.0
      %706 = vmatprep.subr.mxu0 0.0
      %707 = vmatpush1.msra.mxu0 0.0
      %708 = vmatprep.subr.mxu0 0.0
      %709 = vmatpush1.msra.mxu0 0.0
      %710 = vmatprep.subr.mxu0 0.0
      %711 = vmatpush1.msra.mxu0 0.0
      %712 = vmatprep.subr.mxu0 %v667
      %713 = vmatpush1.msra.mxu0 %v663
      %714 = vmatprep.subr.mxu0 %v658
      %715 = vmatpush1.msra.mxu0 %v654
      %716 = vmatprep.subr.mxu0 %v649
      %717 = vmatpush1.msra.mxu0 %v645
      %718 = vmatprep.subr.mxu0 %v638
      %719 = vmatpush1.msra.mxu0 %v637
      %720 = vmatprep.subr.mxu0 0.0
      %721 = vmatpush2.msra.mxu0 0.0
      %722 = vmatprep.subr.mxu0 0.0
      %723 = vmatpush2.msra.mxu0 0.0
      %724 = vmatprep.subr.mxu0 0.0
      %725 = vmatpush2.msra.mxu0 0.0
      %726 = vmatprep.subr.mxu0 0.0
      %727 = vmatpush2.msra.mxu0 0.0
      %728 = vmatprep.subr.mxu0 0.0
      %729 = vmatpush2.msra.mxu0 0.0
      %730 = vmatprep.subr.mxu0 0.0
      %731 = vmatpush2.msra.mxu0 0.0
      %732 = vmatprep.subr.mxu0 0.0
      %733 = vmatpush2.msra.mxu0 0.0
      %734 = vmatprep.subr.mxu0 0.0
      %735 = vmatpush2.msra.mxu0 0.0
      %736 = vmatprep.subr.mxu0 0.0
      %737 = vmatpush2.msra.mxu0 0.0
      %738 = vmatprep.subr.mxu0 0.0
      %739 = vmatpush2.msra.mxu0 0.0
      %740 = vmatprep.subr.mxu0 0.0
      %741 = vmatpush2.msra.mxu0 0.0
      %742 = vmatprep.subr.mxu0 0.0
      %743 = vmatpush2.msra.mxu0 0.0
      %744 = vmatprep.subr.mxu0 0.0
      %745 = vmatpush2.msra.mxu0 0.0
      %746 = vmatprep.subr.mxu0 0.0
      %747 = vmatpush2.msra.mxu0 0.0
      %748 = vmatprep.subr.mxu0 0.0
      %749 = vmatpush2.msra.mxu0 0.0
      %750 = vmatprep.subr.mxu0 0.0
      %751 = vmatpush2.msra.mxu0 0.0
      %752 = vmatprep.mubr.f32.mxu0 0.0
      %753 = vmatmul.mubr.f32.gmra.mxu0 %v683
      %v754 = vpop.f32.mrf.mxu0
      %v755 = vadd.f32 %v675, %v754
      %v756 = vpop.f32.mrf.mxu0
      %v757 = vadd.f32 %v675, %v756
      %758 = vmatprep.mubr.f32.mxu0 0.0
      %759 = vmatmul.mubr.f32.gmra.mxu0 %v686
      %v760 = vpop.f32.mrf.mxu0
      %v761 = vadd.f32 %v680, %v760
      %v762 = vpop.f32.mrf.mxu0
      %v763 = vadd.f32 %v680, %v762
      %764 = vdwg.mxu0
      %v765 = vmax.f32 %v755, 0.0
      %v766 = vmax.f32 %v757, 0.0
      %v767 = vmax.f32 %v761, 0.0
      %v768 = vmax.f32 %v763, 0.0
      %v771 = vcombine.high %v765, %v765
      %v773 = vunpack.c.l.s4 1966171168
      %v774 = vunpack.c.0.s8 %v773
      %v775 = vlaneseq
      %v776 = vshrl.u32 %v775, 7
      %v777 = vsub.s32 %v774, %v776
      %v778 = vrot.slane %v765, %v777
      %v780 = vunpack.c.l.s4 1966171168
      %v781 = vunpack.c.0.s8 %v780
      %v782 = vlaneseq
      %v783 = vshrl.u32 %v782, 7
      %v784 = vsub.s32 %v781, %v783
      %v785 = vrot.slane %v771, %v784
      %v786 = vcombine.high %v778, %v778
      %v787 = vcombine.high %v785, %v785
      %v789 = vunpack.c.l.s4 1966171168
      %v790 = vunpack.c.0.s8 %v789
      %v791 = vlaneseq
      %v792 = vshrl.u32 %v791, 7
      %v793 = vsub.s32 %v790, %v792
      %v794 = vrot.slane %v778, %v793
      %v796 = vunpack.c.l.s4 1966171168
      %v797 = vunpack.c.0.s8 %v796
      %v798 = vlaneseq
      %v799 = vshrl.u32 %v798, 7
      %v800 = vsub.s32 %v797, %v799
      %v801 = vrot.slane %v785, %v800
      %v803 = vunpack.c.l.s4 1966171168
      %v804 = vunpack.c.0.s8 %v803
      %v805 = vlaneseq
      %v806 = vshrl.u32 %v805, 7
      %v807 = vsub.s32 %v804, %v806
      %v808 = vrot.slane %v786, %v807
      %v810 = vunpack.c.l.s4 1966171168
      %v811 = vunpack.c.0.s8 %v810
      %v812 = vlaneseq
      %v813 = vshrl.u32 %v812, 7
      %v814 = vsub.s32 %v811, %v813
      %v815 = vrot.slane %v787, %v814
      %v816 = vcombine.high %v794, %v794
      %v817 = vcombine.high %v801, %v801
      %v818 = vcombine.high %v808, %v808
      %v819 = vcombine.high %v815, %v815
      %v820 = vcombine.high %v767, %v767
      %v822 = vunpack.c.l.s4 1966171168
      %v823 = vunpack.c.0.s8 %v822
      %v824 = vlaneseq
      %v825 = vshrl.u32 %v824, 7
      %v826 = vsub.s32 %v823, %v825
      %v827 = vrot.slane %v767, %v826
      %v829 = vunpack.c.l.s4 1966171168
      %v830 = vunpack.c.0.s8 %v829
      %v831 = vlaneseq
      %v832 = vshrl.u32 %v831, 7
      %v833 = vsub.s32 %v830, %v832
      %v834 = vrot.slane %v820, %v833
      %v835 = vcombine.high %v827, %v827
      %v836 = vcombine.high %v834, %v834
      %v838 = vunpack.c.l.s4 1966171168
      %v839 = vunpack.c.0.s8 %v838
      %v840 = vlaneseq
      %v841 = vshrl.u32 %v840, 7
      %v842 = vsub.s32 %v839, %v841
      %v843 = vrot.slane %v827, %v842
      %v845 = vunpack.c.l.s4 1966171168
      %v846 = vunpack.c.0.s8 %v845
      %v847 = vlaneseq
      %v848 = vshrl.u32 %v847, 7
      %v849 = vsub.s32 %v846, %v848
      %v850 = vrot.slane %v834, %v849
      %v852 = vunpack.c.l.s4 1966171168
      %v853 = vunpack.c.0.s8 %v852
      %v854 = vlaneseq
      %v855 = vshrl.u32 %v854, 7
      %v856 = vsub.s32 %v853, %v855
      %v857 = vrot.slane %v835, %v856
      %v859 = vunpack.c.l.s4 1966171168
      %v860 = vunpack.c.0.s8 %v859
      %v861 = vlaneseq
      %v862 = vshrl.u32 %v861, 7
      %v863 = vsub.s32 %v860, %v862
      %v864 = vrot.slane %v836, %v863
      %v865 = vcombine.high %v843, %v843
      %v866 = vcombine.high %v850, %v850
      %v867 = vcombine.high %v857, %v857
      %v868 = vcombine.high %v864, %v864
      %vm885 = vcmask 98304
      %886 = vst.msk [vmem:[%s332] sm:$0x1] %vm885, %v794
      %887 = vst.msk [vmem:[%s332 + $0x10] sm:$0x1] %vm885, %v808
      %888 = vst.msk [vmem:[%s332 + $0x20] sm:$0x1] %vm885, %v816
      %889 = vst.msk [vmem:[%s332 + $0x30] sm:$0x1] %vm885, %v818
      %890 = vst.msk [vmem:[%s332 + $0x40] sm:$0x1] %vm885, %v801
      %891 = vst.msk [vmem:[%s332 + $0x50] sm:$0x1] %vm885, %v815
      %892 = vst.msk [vmem:[%s332 + $0x60] sm:$0x1] %vm885, %v817
      %893 = vst.msk [vmem:[%s332 + $0x70] sm:$0x1] %vm885, %v819
      %894 = vst.msk [vmem:[%s332 + $0x80] sm:$0x1] %vm885, %v843
      %895 = vst.msk [vmem:[%s332 + $0x90] sm:$0x1] %vm885, %v857
      %896 = vst.msk [vmem:[%s332 + $0xa0] sm:$0x1] %vm885, %v865
      %897 = vst.msk [vmem:[%s332 + $0xb0] sm:$0x1] %vm885, %v867
      %898 = vst.msk [vmem:[%s332 + $0xc0] sm:$0x1] %vm885, %v850
      %899 = vst.msk [vmem:[%s332 + $0xd0] sm:$0x1] %vm885, %v864
      %900 = vst.msk [vmem:[%s332 + $0xe0] sm:$0x1] %vm885, %v866
      %901 = vst.msk [vmem:[%s332 + $0xf0] sm:$0x1] %vm885, %v868
      %v902 = vlaneseq
      %v903 = vshrl.u32 %v902, 7
      %v904 = vsub.s32 0, %v903
      %v905 = vrot.slane %v794, %v904
      %v906 = vlaneseq
      %v907 = vshrl.u32 %v906, 7
      %v908 = vsub.s32 0, %v907
      %v909 = vrot.slane %v808, %v908
      %v910 = vlaneseq
      %v911 = vshrl.u32 %v910, 7
      %v912 = vsub.s32 0, %v911
      %v913 = vrot.slane %v816, %v912
      %v914 = vlaneseq
      %v915 = vshrl.u32 %v914, 7
      %v916 = vsub.s32 0, %v915
      %v917 = vrot.slane %v818, %v916
      %v918 = vlaneseq
      %v919 = vshrl.u32 %v918, 7
      %v920 = vsub.s32 0, %v919
      %v921 = vrot.slane %v801, %v920
      %v922 = vlaneseq
      %v923 = vshrl.u32 %v922, 7
      %v924 = vsub.s32 0, %v923
      %v925 = vrot.slane %v815, %v924
      %v926 = vlaneseq
      %v927 = vshrl.u32 %v926, 7
      %v928 = vsub.s32 0, %v927
      %v929 = vrot.slane %v817, %v928
      %v930 = vlaneseq
      %v931 = vshrl.u32 %v930, 7
      %v932 = vsub.s32 0, %v931
      %v933 = vrot.slane %v819, %v932
      %v934 = vlaneseq
      %v935 = vshrl.u32 %v934, 7
      %v936 = vsub.s32 0, %v935
      %v937 = vrot.slane %v843, %v936
      %v938 = vlaneseq
      %v939 = vshrl.u32 %v938, 7
      %v940 = vsub.s32 0, %v939
      %v941 = vrot.slane %v857, %v940
      %v942 = vlaneseq
      %v943 = vshrl.u32 %v942, 7
      %v944 = vsub.s32 0, %v943
      %v945 = vrot.slane %v865, %v944
      %v946 = vlaneseq
      %v947 = vshrl.u32 %v946, 7
      %v948 = vsub.s32 0, %v947
      %v949 = vrot.slane %v867, %v948
      %v950 = vlaneseq
      %v951 = vshrl.u32 %v950, 7
      %v952 = vsub.s32 0, %v951
      %v953 = vrot.slane %v850, %v952
      %v954 = vlaneseq
      %v955 = vshrl.u32 %v954, 7
      %v956 = vsub.s32 0, %v955
      %v957 = vrot.slane %v864, %v956
      %v958 = vlaneseq
      %v959 = vshrl.u32 %v958, 7
      %v960 = vsub.s32 0, %v959
      %v961 = vrot.slane %v866, %v960
      %v962 = vlaneseq
      %v963 = vshrl.u32 %v962, 7
      %v964 = vsub.s32 0, %v963
      %v965 = vrot.slane %v868, %v964
      %966 = vrot.lane.b32.xlu0 %v905, 112
      %v967 = vpop.permute.xlu0 %966
      %968 = vrot.lane.b32.xlu0 %v909, 112
      %v969 = vpop.permute.xlu0 %968
      %970 = vrot.lane.b32.xlu0 %v913, 112
      %v971 = vpop.permute.xlu0 %970
      %972 = vrot.lane.b32.xlu0 %v917, 112
      %v973 = vpop.permute.xlu0 %972
      %974 = vrot.lane.b32.xlu0 %v921, 112
      %v975 = vpop.permute.xlu0 %974
      %976 = vrot.lane.b32.xlu0 %v925, 112
      %v977 = vpop.permute.xlu0 %976
      %978 = vrot.lane.b32.xlu0 %v929, 112
      %v979 = vpop.permute.xlu0 %978
      %980 = vrot.lane.b32.xlu0 %v933, 112
      %v981 = vpop.permute.xlu0 %980
      %982 = vrot.lane.b32.xlu0 %v937, 112
      %v983 = vpop.permute.xlu0 %982
      %984 = vrot.lane.b32.xlu0 %v941, 112
      %v985 = vpop.permute.xlu0 %984
      %986 = vrot.lane.b32.xlu0 %v945, 112
      %v987 = vpop.permute.xlu0 %986
      %988 = vrot.lane.b32.xlu0 %v949, 112
      %v989 = vpop.permute.xlu0 %988
      %990 = vrot.lane.b32.xlu0 %v953, 112
      %v991 = vpop.permute.xlu0 %990
      %992 = vrot.lane.b32.xlu0 %v957, 112
      %v993 = vpop.permute.xlu0 %992
      %994 = vrot.lane.b32.xlu0 %v961, 112
      %v995 = vpop.permute.xlu0 %994
      %996 = vrot.lane.b32.xlu0 %v965, 112
      %v997 = vpop.permute.xlu0 %996
      %1014 = vst.msk [vmem:[%s332 + $0x1] sm:$0x1] %vm885, %v967
      %1015 = vst.msk [vmem:[%s332 + $0x11] sm:$0x1] %vm885, %v969
      %1016 = vst.msk [vmem:[%s332 + $0x21] sm:$0x1] %vm885, %v971
      %1017 = vst.msk [vmem:[%s332 + $0x31] sm:$0x1] %vm885, %v973
      %1018 = vst.msk [vmem:[%s332 + $0x41] sm:$0x1] %vm885, %v975
      %1019 = vst.msk [vmem:[%s332 + $0x51] sm:$0x1] %vm885, %v977
      %1020 = vst.msk [vmem:[%s332 + $0x61] sm:$0x1] %vm885, %v979
      %1021 = vst.msk [vmem:[%s332 + $0x71] sm:$0x1] %vm885, %v981
      %1022 = vst.msk [vmem:[%s332 + $0x81] sm:$0x1] %vm885, %v983
      %1023 = vst.msk [vmem:[%s332 + $0x91] sm:$0x1] %vm885, %v985
      %1024 = vst.msk [vmem:[%s332 + $0xa1] sm:$0x1] %vm885, %v987
      %1025 = vst.msk [vmem:[%s332 + $0xb1] sm:$0x1] %vm885, %v989
      %1026 = vst.msk [vmem:[%s332 + $0xc1] sm:$0x1] %vm885, %v991
      %1027 = vst.msk [vmem:[%s332 + $0xd1] sm:$0x1] %vm885, %v993
      %1028 = vst.msk [vmem:[%s332 + $0xe1] sm:$0x1] %vm885, %v995
      %1029 = vst.msk [vmem:[%s332 + $0xf1] sm:$0x1] %vm885, %v997
      %1030 = vrot.lane.b32.xlu0 %v905, 96
      %v1031 = vpop.permute.xlu0 %1030
      %1032 = vrot.lane.b32.xlu0 %v909, 96
      %v1033 = vpop.permute.xlu0 %1032
      %1034 = vrot.lane.b32.xlu0 %v913, 96
      %v1035 = vpop.permute.xlu0 %1034
      %1036 = vrot.lane.b32.xlu0 %v917, 96
      %v1037 = vpop.permute.xlu0 %1036
      %1038 = vrot.lane.b32.xlu0 %v921, 96
      %v1039 = vpop.permute.xlu0 %1038
      %1040 = vrot.lane.b32.xlu0 %v925, 96
      %v1041 = vpop.permute.xlu0 %1040
      %1042 = vrot.lane.b32.xlu0 %v929, 96
      %v1043 = vpop.permute.xlu0 %1042
      %1044 = vrot.lane.b32.xlu0 %v933, 96
      %v1045 = vpop.permute.xlu0 %1044
      %1046 = vrot.lane.b32.xlu0 %v937, 96
      %v1047 = vpop.permute.xlu0 %1046
      %1048 = vrot.lane.b32.xlu0 %v941, 96
      %v1049 = vpop.permute.xlu0 %1048
      %1050 = vrot.lane.b32.xlu0 %v945, 96
      %v1051 = vpop.permute.xlu0 %1050
      %1052 = vrot.lane.b32.xlu0 %v949, 96
      %v1053 = vpop.permute.xlu0 %1052
      %1054 = vrot.lane.b32.xlu0 %v953, 96
      %v1055 = vpop.permute.xlu0 %1054
      %1056 = vrot.lane.b32.xlu0 %v957, 96
      %v1057 = vpop.permute.xlu0 %1056
      %1058 = vrot.lane.b32.xlu0 %v961, 96
      %v1059 = vpop.permute.xlu0 %1058
      %1060 = vrot.lane.b32.xlu0 %v965, 96
      %v1061 = vpop.permute.xlu0 %1060
      %1078 = vst.msk [vmem:[%s332 + $0x2] sm:$0x1] %vm885, %v1031
      %1079 = vst.msk [vmem:[%s332 + $0x12] sm:$0x1] %vm885, %v1033
      %1080 = vst.msk [vmem:[%s332 + $0x22] sm:$0x1] %vm885, %v1035
      %1081 = vst.msk [vmem:[%s332 + $0x32] sm:$0x1] %vm885, %v1037
      %1082 = vst.msk [vmem:[%s332 + $0x42] sm:$0x1] %vm885, %v1039
      %1083 = vst.msk [vmem:[%s332 + $0x52] sm:$0x1] %vm885, %v1041
      %1084 = vst.msk [vmem:[%s332 + $0x62] sm:$0x1] %vm885, %v1043
      %1085 = vst.msk [vmem:[%s332 + $0x72] sm:$0x1] %vm885, %v1045
      %1086 = vst.msk [vmem:[%s332 + $0x82] sm:$0x1] %vm885, %v1047
      %1087 = vst.msk [vmem:[%s332 + $0x92] sm:$0x1] %vm885, %v1049
      %1088 = vst.msk [vmem:[%s332 + $0xa2] sm:$0x1] %vm885, %v1051
      %1089 = vst.msk [vmem:[%s332 + $0xb2] sm:$0x1] %vm885, %v1053
      %1090 = vst.msk [vmem:[%s332 + $0xc2] sm:$0x1] %vm885, %v1055
      %1091 = vst.msk [vmem:[%s332 + $0xd2] sm:$0x1] %vm885, %v1057
      %1092 = vst.msk [vmem:[%s332 + $0xe2] sm:$0x1] %vm885, %v1059
      %1093 = vst.msk [vmem:[%s332 + $0xf2] sm:$0x1] %vm885, %v1061
      %1094 = vrot.lane.b32.xlu0 %v905, 80
      %v1095 = vpop.permute.xlu0 %1094
      %1096 = vrot.lane.b32.xlu0 %v909, 80
      %v1097 = vpop.permute.xlu0 %1096
      %1098 = vrot.lane.b32.xlu0 %v913, 80
      %v1099 = vpop.permute.xlu0 %1098
      %1100 = vrot.lane.b32.xlu0 %v917, 80
      %v1101 = vpop.permute.xlu0 %1100
      %1102 = vrot.lane.b32.xlu0 %v921, 80
      %v1103 = vpop.permute.xlu0 %1102
      %1104 = vrot.lane.b32.xlu0 %v925, 80
      %v1105 = vpop.permute.xlu0 %1104
      %1106 = vrot.lane.b32.xlu0 %v929, 80
      %v1107 = vpop.permute.xlu0 %1106
      %1108 = vrot.lane.b32.xlu0 %v933, 80
      %v1109 = vpop.permute.xlu0 %1108
      %1110 = vrot.lane.b32.xlu0 %v937, 80
      %v1111 = vpop.permute.xlu0 %1110
      %1112 = vrot.lane.b32.xlu0 %v941, 80
      %v1113 = vpop.permute.xlu0 %1112
      %1114 = vrot.lane.b32.xlu0 %v945, 80
      %v1115 = vpop.permute.xlu0 %1114
      %1116 = vrot.lane.b32.xlu0 %v949, 80
      %v1117 = vpop.permute.xlu0 %1116
      %1118 = vrot.lane.b32.xlu0 %v953, 80
      %v1119 = vpop.permute.xlu0 %1118
      %1120 = vrot.lane.b32.xlu0 %v957, 80
      %v1121 = vpop.permute.xlu0 %1120
      %1122 = vrot.lane.b32.xlu0 %v961, 80
      %v1123 = vpop.permute.xlu0 %1122
      %1124 = vrot.lane.b32.xlu0 %v965, 80
      %v1125 = vpop.permute.xlu0 %1124
      %1142 = vst.msk [vmem:[%s332 + $0x3] sm:$0x1] %vm885, %v1095
      %1143 = vst.msk [vmem:[%s332 + $0x13] sm:$0x1] %vm885, %v1097
      %1144 = vst.msk [vmem:[%s332 + $0x23] sm:$0x1] %vm885, %v1099
      %1145 = vst.msk [vmem:[%s332 + $0x33] sm:$0x1] %vm885, %v1101
      %1146 = vst.msk [vmem:[%s332 + $0x43] sm:$0x1] %vm885, %v1103
      %1147 = vst.msk [vmem:[%s332 + $0x53] sm:$0x1] %vm885, %v1105
      %1148 = vst.msk [vmem:[%s332 + $0x63] sm:$0x1] %vm885, %v1107
      %1149 = vst.msk [vmem:[%s332 + $0x73] sm:$0x1] %vm885, %v1109
      %1150 = vst.msk [vmem:[%s332 + $0x83] sm:$0x1] %vm885, %v1111
      %1151 = vst.msk [vmem:[%s332 + $0x93] sm:$0x1] %vm885, %v1113
      %1152 = vst.msk [vmem:[%s332 + $0xa3] sm:$0x1] %vm885, %v1115
      %1153 = vst.msk [vmem:[%s332 + $0xb3] sm:$0x1] %vm885, %v1117
      %1154 = vst.msk [vmem:[%s332 + $0xc3] sm:$0x1] %vm885, %v1119
      %1155 = vst.msk [vmem:[%s332 + $0xd3] sm:$0x1] %vm885, %v1121
      %1156 = vst.msk [vmem:[%s332 + $0xe3] sm:$0x1] %vm885, %v1123
      %1157 = vst.msk [vmem:[%s332 + $0xf3] sm:$0x1] %vm885, %v1125
      %1158 = vrot.lane.b32.xlu0 %v905, 64
      %v1159 = vpop.permute.xlu0 %1158
      %1160 = vrot.lane.b32.xlu0 %v909, 64
      %v1161 = vpop.permute.xlu0 %1160
      %1162 = vrot.lane.b32.xlu0 %v913, 64
      %v1163 = vpop.permute.xlu0 %1162
      %1164 = vrot.lane.b32.xlu0 %v917, 64
      %v1165 = vpop.permute.xlu0 %1164
      %1166 = vrot.lane.b32.xlu0 %v921, 64
      %v1167 = vpop.permute.xlu0 %1166
      %1168 = vrot.lane.b32.xlu0 %v925, 64
      %v1169 = vpop.permute.xlu0 %1168
      %1170 = vrot.lane.b32.xlu0 %v929, 64
      %v1171 = vpop.permute.xlu0 %1170
      %1172 = vrot.lane.b32.xlu0 %v933, 64
      %v1173 = vpop.permute.xlu0 %1172
      %1174 = vrot.lane.b32.xlu0 %v937, 64
      %v1175 = vpop.permute.xlu0 %1174
      %1176 = vrot.lane.b32.xlu0 %v941, 64
      %v1177 = vpop.permute.xlu0 %1176
      %1178 = vrot.lane.b32.xlu0 %v945, 64
      %v1179 = vpop.permute.xlu0 %1178
      %1180 = vrot.lane.b32.xlu0 %v949, 64
      %v1181 = vpop.permute.xlu0 %1180
      %1182 = vrot.lane.b32.xlu0 %v953, 64
      %v1183 = vpop.permute.xlu0 %1182
      %1184 = vrot.lane.b32.xlu0 %v957, 64
      %v1185 = vpop.permute.xlu0 %1184
      %1186 = vrot.lane.b32.xlu0 %v961, 64
      %v1187 = vpop.permute.xlu0 %1186
      %1188 = vrot.lane.b32.xlu0 %v965, 64
      %v1189 = vpop.permute.xlu0 %1188
      %1206 = vst.msk [vmem:[%s332 + $0x4] sm:$0x1] %vm885, %v1159
      %1207 = vst.msk [vmem:[%s332 + $0x14] sm:$0x1] %vm885, %v1161
      %1208 = vst.msk [vmem:[%s332 + $0x24] sm:$0x1] %vm885, %v1163
      %1209 = vst.msk [vmem:[%s332 + $0x34] sm:$0x1] %vm885, %v1165
      %1210 = vst.msk [vmem:[%s332 + $0x44] sm:$0x1] %vm885, %v1167
      %1211 = vst.msk [vmem:[%s332 + $0x54] sm:$0x1] %vm885, %v1169
      %1212 = vst.msk [vmem:[%s332 + $0x64] sm:$0x1] %vm885, %v1171
      %1213 = vst.msk [vmem:[%s332 + $0x74] sm:$0x1] %vm885, %v1173
      %1214 = vst.msk [vmem:[%s332 + $0x84] sm:$0x1] %vm885, %v1175
      %1215 = vst.msk [vmem:[%s332 + $0x94] sm:$0x1] %vm885, %v1177
      %1216 = vst.msk [vmem:[%s332 + $0xa4] sm:$0x1] %vm885, %v1179
      %1217 = vst.msk [vmem:[%s332 + $0xb4] sm:$0x1] %vm885, %v1181
      %1218 = vst.msk [vmem:[%s332 + $0xc4] sm:$0x1] %vm885, %v1183
      %1219 = vst.msk [vmem:[%s332 + $0xd4] sm:$0x1] %vm885, %v1185
      %1220 = vst.msk [vmem:[%s332 + $0xe4] sm:$0x1] %vm885, %v1187
      %1221 = vst.msk [vmem:[%s332 + $0xf4] sm:$0x1] %vm885, %v1189
      %1222 = vrot.lane.b32.xlu0 %v905, 48
      %v1223 = vpop.permute.xlu0 %1222
      %1224 = vrot.lane.b32.xlu0 %v909, 48
      %v1225 = vpop.permute.xlu0 %1224
      %1226 = vrot.lane.b32.xlu0 %v913, 48
      %v1227 = vpop.permute.xlu0 %1226
      %1228 = vrot.lane.b32.xlu0 %v917, 48
      %v1229 = vpop.permute.xlu0 %1228
      %1230 = vrot.lane.b32.xlu0 %v921, 48
      %v1231 = vpop.permute.xlu0 %1230
      %1232 = vrot.lane.b32.xlu0 %v925, 48
      %v1233 = vpop.permute.xlu0 %1232
      %1234 = vrot.lane.b32.xlu0 %v929, 48
      %v1235 = vpop.permute.xlu0 %1234
      %1236 = vrot.lane.b32.xlu0 %v933, 48
      %v1237 = vpop.permute.xlu0 %1236
      %1238 = vrot.lane.b32.xlu0 %v937, 48
      %v1239 = vpop.permute.xlu0 %1238
      %1240 = vrot.lane.b32.xlu0 %v941, 48
      %v1241 = vpop.permute.xlu0 %1240
      %1242 = vrot.lane.b32.xlu0 %v945, 48
      %v1243 = vpop.permute.xlu0 %1242
      %1244 = vrot.lane.b32.xlu0 %v949, 48
      %v1245 = vpop.permute.xlu0 %1244
      %1246 = vrot.lane.b32.xlu0 %v953, 48
      %v1247 = vpop.permute.xlu0 %1246
      %1248 = vrot.lane.b32.xlu0 %v957, 48
      %v1249 = vpop.permute.xlu0 %1248
      %1250 = vrot.lane.b32.xlu0 %v961, 48
      %v1251 = vpop.permute.xlu0 %1250
      %1252 = vrot.lane.b32.xlu0 %v965, 48
      %v1253 = vpop.permute.xlu0 %1252
      %1270 = vst.msk [vmem:[%s332 + $0x5] sm:$0x1] %vm885, %v1223
      %1271 = vst.msk [vmem:[%s332 + $0x15] sm:$0x1] %vm885, %v1225
      %1272 = vst.msk [vmem:[%s332 + $0x25] sm:$0x1] %vm885, %v1227
      %1273 = vst.msk [vmem:[%s332 + $0x35] sm:$0x1] %vm885, %v1229
      %1274 = vst.msk [vmem:[%s332 + $0x45] sm:$0x1] %vm885, %v1231
      %1275 = vst.msk [vmem:[%s332 + $0x55] sm:$0x1] %vm885, %v1233
      %1276 = vst.msk [vmem:[%s332 + $0x65] sm:$0x1] %vm885, %v1235
      %1277 = vst.msk [vmem:[%s332 + $0x75] sm:$0x1] %vm885, %v1237
      %1278 = vst.msk [vmem:[%s332 + $0x85] sm:$0x1] %vm885, %v1239
      %1279 = vst.msk [vmem:[%s332 + $0x95] sm:$0x1] %vm885, %v1241
      %1280 = vst.msk [vmem:[%s332 + $0xa5] sm:$0x1] %vm885, %v1243
      %1281 = vst.msk [vmem:[%s332 + $0xb5] sm:$0x1] %vm885, %v1245
      %1282 = vst.msk [vmem:[%s332 + $0xc5] sm:$0x1] %vm885, %v1247
      %1283 = vst.msk [vmem:[%s332 + $0xd5] sm:$0x1] %vm885, %v1249
      %1284 = vst.msk [vmem:[%s332 + $0xe5] sm:$0x1] %vm885, %v1251
      %1285 = vst.msk [vmem:[%s332 + $0xf5] sm:$0x1] %vm885, %v1253
      %1286 = vrot.lane.b32.xlu0 %v905, 32
      %v1287 = vpop.permute.xlu0 %1286
      %1288 = vrot.lane.b32.xlu0 %v909, 32
      %v1289 = vpop.permute.xlu0 %1288
      %1290 = vrot.lane.b32.xlu0 %v913, 32
      %v1291 = vpop.permute.xlu0 %1290
      %1292 = vrot.lane.b32.xlu0 %v917, 32
      %v1293 = vpop.permute.xlu0 %1292
      %1294 = vrot.lane.b32.xlu0 %v921, 32
      %v1295 = vpop.permute.xlu0 %1294
      %1296 = vrot.lane.b32.xlu0 %v925, 32
      %v1297 = vpop.permute.xlu0 %1296
      %1298 = vrot.lane.b32.xlu0 %v929, 32
      %v1299 = vpop.permute.xlu0 %1298
      %1300 = vrot.lane.b32.xlu0 %v933, 32
      %v1301 = vpop.permute.xlu0 %1300
      %1302 = vrot.lane.b32.xlu0 %v937, 32
      %v1303 = vpop.permute.xlu0 %1302
      %1304 = vrot.lane.b32.xlu0 %v941, 32
      %v1305 = vpop.permute.xlu0 %1304
      %1306 = vrot.lane.b32.xlu0 %v945, 32
      %v1307 = vpop.permute.xlu0 %1306
      %1308 = vrot.lane.b32.xlu0 %v949, 32
      %v1309 = vpop.permute.xlu0 %1308
      %1310 = vrot.lane.b32.xlu0 %v953, 32
      %v1311 = vpop.permute.xlu0 %1310
      %1312 = vrot.lane.b32.xlu0 %v957, 32
      %v1313 = vpop.permute.xlu0 %1312
      %1314 = vrot.lane.b32.xlu0 %v961, 32
      %v1315 = vpop.permute.xlu0 %1314
      %1316 = vrot.lane.b32.xlu0 %v965, 32
      %v1317 = vpop.permute.xlu0 %1316
      %1334 = vst.msk [vmem:[%s332 + $0x6] sm:$0x1] %vm885, %v1287
      %1335 = vst.msk [vmem:[%s332 + $0x16] sm:$0x1] %vm885, %v1289
      %1336 = vst.msk [vmem:[%s332 + $0x26] sm:$0x1] %vm885, %v1291
      %1337 = vst.msk [vmem:[%s332 + $0x36] sm:$0x1] %vm885, %v1293
      %1338 = vst.msk [vmem:[%s332 + $0x46] sm:$0x1] %vm885, %v1295
      %1339 = vst.msk [vmem:[%s332 + $0x56] sm:$0x1] %vm885, %v1297
      %1340 = vst.msk [vmem:[%s332 + $0x66] sm:$0x1] %vm885, %v1299
      %1341 = vst.msk [vmem:[%s332 + $0x76] sm:$0x1] %vm885, %v1301
      %1342 = vst.msk [vmem:[%s332 + $0x86] sm:$0x1] %vm885, %v1303
      %1343 = vst.msk [vmem:[%s332 + $0x96] sm:$0x1] %vm885, %v1305
      %1344 = vst.msk [vmem:[%s332 + $0xa6] sm:$0x1] %vm885, %v1307
      %1345 = vst.msk [vmem:[%s332 + $0xb6] sm:$0x1] %vm885, %v1309
      %1346 = vst.msk [vmem:[%s332 + $0xc6] sm:$0x1] %vm885, %v1311
      %1347 = vst.msk [vmem:[%s332 + $0xd6] sm:$0x1] %vm885, %v1313
      %1348 = vst.msk [vmem:[%s332 + $0xe6] sm:$0x1] %vm885, %v1315
      %1349 = vst.msk [vmem:[%s332 + $0xf6] sm:$0x1] %vm885, %v1317
      %1350 = vrot.lane.b32.xlu0 %v905, 16
      %v1351 = vpop.permute.xlu0 %1350
      %1352 = vrot.lane.b32.xlu0 %v909, 16
      %v1353 = vpop.permute.xlu0 %1352
      %1354 = vrot.lane.b32.xlu0 %v913, 16
      %v1355 = vpop.permute.xlu0 %1354
      %1356 = vrot.lane.b32.xlu0 %v917, 16
      %v1357 = vpop.permute.xlu0 %1356
      %1358 = vrot.lane.b32.xlu0 %v921, 16
      %v1359 = vpop.permute.xlu0 %1358
      %1360 = vrot.lane.b32.xlu0 %v925, 16
      %v1361 = vpop.permute.xlu0 %1360
      %1362 = vrot.lane.b32.xlu0 %v929, 16
      %v1363 = vpop.permute.xlu0 %1362
      %1364 = vrot.lane.b32.xlu0 %v933, 16
      %v1365 = vpop.permute.xlu0 %1364
      %1366 = vrot.lane.b32.xlu0 %v937, 16
      %v1367 = vpop.permute.xlu0 %1366
      %1368 = vrot.lane.b32.xlu0 %v941, 16
      %v1369 = vpop.permute.xlu0 %1368
      %1370 = vrot.lane.b32.xlu0 %v945, 16
      %v1371 = vpop.permute.xlu0 %1370
      %1372 = vrot.lane.b32.xlu0 %v949, 16
      %v1373 = vpop.permute.xlu0 %1372
      %1374 = vrot.lane.b32.xlu0 %v953, 16
      %v1375 = vpop.permute.xlu0 %1374
      %1376 = vrot.lane.b32.xlu0 %v957, 16
      %v1377 = vpop.permute.xlu0 %1376
      %1378 = vrot.lane.b32.xlu0 %v961, 16
      %v1379 = vpop.permute.xlu0 %1378
      %1380 = vrot.lane.b32.xlu0 %v965, 16
      %v1381 = vpop.permute.xlu0 %1380
      %1398 = vst.msk [vmem:[%s332 + $0x7] sm:$0x1] %vm885, %v1351
      %1399 = vst.msk [vmem:[%s332 + $0x17] sm:$0x1] %vm885, %v1353
      %1400 = vst.msk [vmem:[%s332 + $0x27] sm:$0x1] %vm885, %v1355
      %1401 = vst.msk [vmem:[%s332 + $0x37] sm:$0x1] %vm885, %v1357
      %1402 = vst.msk [vmem:[%s332 + $0x47] sm:$0x1] %vm885, %v1359
      %1403 = vst.msk [vmem:[%s332 + $0x57] sm:$0x1] %vm885, %v1361
      %1404 = vst.msk [vmem:[%s332 + $0x67] sm:$0x1] %vm885, %v1363
      %1405 = vst.msk [vmem:[%s332 + $0x77] sm:$0x1] %vm885, %v1365
      %1406 = vst.msk [vmem:[%s332 + $0x87] sm:$0x1] %vm885, %v1367
      %1407 = vst.msk [vmem:[%s332 + $0x97] sm:$0x1] %vm885, %v1369
      %1408 = vst.msk [vmem:[%s332 + $0xa7] sm:$0x1] %vm885, %v1371
      %1409 = vst.msk [vmem:[%s332 + $0xb7] sm:$0x1] %vm885, %v1373
      %1410 = vst.msk [vmem:[%s332 + $0xc7] sm:$0x1] %vm885, %v1375
      %1411 = vst.msk [vmem:[%s332 + $0xd7] sm:$0x1] %vm885, %v1377
      %1412 = vst.msk [vmem:[%s332 + $0xe7] sm:$0x1] %vm885, %v1379
      %1413 = vst.msk [vmem:[%s332 + $0xf7] sm:$0x1] %vm885, %v1381
      %v1416 = vcombine.high %v766, %v766
      %v1418 = vunpack.c.l.s4 1966171168
      %v1419 = vunpack.c.0.s8 %v1418
      %v1420 = vlaneseq
      %v1421 = vshrl.u32 %v1420, 7
      %v1422 = vsub.s32 %v1419, %v1421
      %v1423 = vrot.slane %v766, %v1422
      %v1425 = vunpack.c.l.s4 1966171168
      %v1426 = vunpack.c.0.s8 %v1425
      %v1427 = vlaneseq
      %v1428 = vshrl.u32 %v1427, 7
      %v1429 = vsub.s32 %v1426, %v1428
      %v1430 = vrot.slane %v1416, %v1429
      %v1431 = vcombine.high %v1423, %v1423
      %v1432 = vcombine.high %v1430, %v1430
      %v1434 = vunpack.c.l.s4 1966171168
      %v1435 = vunpack.c.0.s8 %v1434
      %v1436 = vlaneseq
      %v1437 = vshrl.u32 %v1436, 7
      %v1438 = vsub.s32 %v1435, %v1437
      %v1439 = vrot.slane %v1423, %v1438
      %v1441 = vunpack.c.l.s4 1966171168
      %v1442 = vunpack.c.0.s8 %v1441
      %v1443 = vlaneseq
      %v1444 = vshrl.u32 %v1443, 7
      %v1445 = vsub.s32 %v1442, %v1444
      %v1446 = vrot.slane %v1430, %v1445
      %v1448 = vunpack.c.l.s4 1966171168
      %v1449 = vunpack.c.0.s8 %v1448
      %v1450 = vlaneseq
      %v1451 = vshrl.u32 %v1450, 7
      %v1452 = vsub.s32 %v1449, %v1451
      %v1453 = vrot.slane %v1431, %v1452
      %v1455 = vunpack.c.l.s4 1966171168
      %v1456 = vunpack.c.0.s8 %v1455
      %v1457 = vlaneseq
      %v1458 = vshrl.u32 %v1457, 7
      %v1459 = vsub.s32 %v1456, %v1458
      %v1460 = vrot.slane %v1432, %v1459
      %v1461 = vcombine.high %v1439, %v1439
      %v1462 = vcombine.high %v1446, %v1446
      %v1463 = vcombine.high %v1453, %v1453
      %v1464 = vcombine.high %v1460, %v1460
      %v1465 = vcombine.high %v768, %v768
      %v1467 = vunpack.c.l.s4 1966171168
      %v1468 = vunpack.c.0.s8 %v1467
      %v1469 = vlaneseq
      %v1470 = vshrl.u32 %v1469, 7
      %v1471 = vsub.s32 %v1468, %v1470
      %v1472 = vrot.slane %v768, %v1471
      %v1474 = vunpack.c.l.s4 1966171168
      %v1475 = vunpack.c.0.s8 %v1474
      %v1476 = vlaneseq
      %v1477 = vshrl.u32 %v1476, 7
      %v1478 = vsub.s32 %v1475, %v1477
      %v1479 = vrot.slane %v1465, %v1478
      %v1480 = vcombine.high %v1472, %v1472
      %v1481 = vcombine.high %v1479, %v1479
      %v1483 = vunpack.c.l.s4 1966171168
      %v1484 = vunpack.c.0.s8 %v1483
      %v1485 = vlaneseq
      %v1486 = vshrl.u32 %v1485, 7
      %v1487 = vsub.s32 %v1484, %v1486
      %v1488 = vrot.slane %v1472, %v1487
      %v1490 = vunpack.c.l.s4 1966171168
      %v1491 = vunpack.c.0.s8 %v1490
      %v1492 = vlaneseq
      %v1493 = vshrl.u32 %v1492, 7
      %v1494 = vsub.s32 %v1491, %v1493
      %v1495 = vrot.slane %v1479, %v1494
      %v1497 = vunpack.c.l.s4 1966171168
      %v1498 = vunpack.c.0.s8 %v1497
      %v1499 = vlaneseq
      %v1500 = vshrl.u32 %v1499, 7
      %v1501 = vsub.s32 %v1498, %v1500
      %v1502 = vrot.slane %v1480, %v1501
      %v1504 = vunpack.c.l.s4 1966171168
      %v1505 = vunpack.c.0.s8 %v1504
      %v1506 = vlaneseq
      %v1507 = vshrl.u32 %v1506, 7
      %v1508 = vsub.s32 %v1505, %v1507
      %v1509 = vrot.slane %v1481, %v1508
      %v1510 = vcombine.high %v1488, %v1488
      %v1511 = vcombine.high %v1495, %v1495
      %v1512 = vcombine.high %v1502, %v1502
      %v1513 = vcombine.high %v1509, %v1509
      %1530 = vst.msk [vmem:[%s332 + $0x8] sm:$0x1] %vm885, %v1439
      %1531 = vst.msk [vmem:[%s332 + $0x18] sm:$0x1] %vm885, %v1453
      %1532 = vst.msk [vmem:[%s332 + $0x28] sm:$0x1] %vm885, %v1461
      %1533 = vst.msk [vmem:[%s332 + $0x38] sm:$0x1] %vm885, %v1463
      %1534 = vst.msk [vmem:[%s332 + $0x48] sm:$0x1] %vm885, %v1446
      %1535 = vst.msk [vmem:[%s332 + $0x58] sm:$0x1] %vm885, %v1460
      %1536 = vst.msk [vmem:[%s332 + $0x68] sm:$0x1] %vm885, %v1462
      %1537 = vst.msk [vmem:[%s332 + $0x78] sm:$0x1] %vm885, %v1464
      %1538 = vst.msk [vmem:[%s332 + $0x88] sm:$0x1] %vm885, %v1488
      %1539 = vst.msk [vmem:[%s332 + $0x98] sm:$0x1] %vm885, %v1502
      %1540 = vst.msk [vmem:[%s332 + $0xa8] sm:$0x1] %vm885, %v1510
      %1541 = vst.msk [vmem:[%s332 + $0xb8] sm:$0x1] %vm885, %v1512
      %1542 = vst.msk [vmem:[%s332 + $0xc8] sm:$0x1] %vm885, %v1495
      %1543 = vst.msk [vmem:[%s332 + $0xd8] sm:$0x1] %vm885, %v1509
      %1544 = vst.msk [vmem:[%s332 + $0xe8] sm:$0x1] %vm885, %v1511
      %1545 = vst.msk [vmem:[%s332 + $0xf8] sm:$0x1] %vm885, %v1513
      %v1546 = vlaneseq
      %v1547 = vshrl.u32 %v1546, 7
      %v1548 = vsub.s32 0, %v1547
      %v1549 = vrot.slane %v1439, %v1548
      %v1550 = vlaneseq
      %v1551 = vshrl.u32 %v1550, 7
      %v1552 = vsub.s32 0, %v1551
      %v1553 = vrot.slane %v1453, %v1552
      %v1554 = vlaneseq
      %v1555 = vshrl.u32 %v1554, 7
      %v1556 = vsub.s32 0, %v1555
      %v1557 = vrot.slane %v1461, %v1556
      %v1558 = vlaneseq
      %v1559 = vshrl.u32 %v1558, 7
      %v1560 = vsub.s32 0, %v1559
      %v1561 = vrot.slane %v1463, %v1560
      %v1562 = vlaneseq
      %v1563 = vshrl.u32 %v1562, 7
      %v1564 = vsub.s32 0, %v1563
      %v1565 = vrot.slane %v1446, %v1564
      %v1566 = vlaneseq
      %v1567 = vshrl.u32 %v1566, 7
      %v1568 = vsub.s32 0, %v1567
      %v1569 = vrot.slane %v1460, %v1568
      %v1570 = vlaneseq
      %v1571 = vshrl.u32 %v1570, 7
      %v1572 = vsub.s32 0, %v1571
      %v1573 = vrot.slane %v1462, %v1572
      %v1574 = vlaneseq
      %v1575 = vshrl.u32 %v1574, 7
      %v1576 = vsub.s32 0, %v1575
      %v1577 = vrot.slane %v1464, %v1576
      %v1578 = vlaneseq
      %v1579 = vshrl.u32 %v1578, 7
      %v1580 = vsub.s32 0, %v1579
      %v1581 = vrot.slane %v1488, %v1580
      %v1582 = vlaneseq
      %v1583 = vshrl.u32 %v1582, 7
      %v1584 = vsub.s32 0, %v1583
      %v1585 = vrot.slane %v1502, %v1584
      %v1586 = vlaneseq
      %v1587 = vshrl.u32 %v1586, 7
      %v1588 = vsub.s32 0, %v1587
      %v1589 = vrot.slane %v1510, %v1588
      %v1590 = vlaneseq
      %v1591 = vshrl.u32 %v1590, 7
      %v1592 = vsub.s32 0, %v1591
      %v1593 = vrot.slane %v1512, %v1592
      %v1594 = vlaneseq
      %v1595 = vshrl.u32 %v1594, 7
      %v1596 = vsub.s32 0, %v1595
      %v1597 = vrot.slane %v1495, %v1596
      %v1598 = vlaneseq
      %v1599 = vshrl.u32 %v1598, 7
      %v1600 = vsub.s32 0, %v1599
      %v1601 = vrot.slane %v1509, %v1600
      %v1602 = vlaneseq
      %v1603 = vshrl.u32 %v1602, 7
      %v1604 = vsub.s32 0, %v1603
      %v1605 = vrot.slane %v1511, %v1604
      %v1606 = vlaneseq
      %v1607 = vshrl.u32 %v1606, 7
      %v1608 = vsub.s32 0, %v1607
      %v1609 = vrot.slane %v1513, %v1608
      %1610 = vrot.lane.b32.xlu0 %v1549, 112
      %v1611 = vpop.permute.xlu0 %1610
      %1612 = vrot.lane.b32.xlu0 %v1553, 112
      %v1613 = vpop.permute.xlu0 %1612
      %1614 = vrot.lane.b32.xlu0 %v1557, 112
      %v1615 = vpop.permute.xlu0 %1614
      %1616 = vrot.lane.b32.xlu0 %v1561, 112
      %v1617 = vpop.permute.xlu0 %1616
      %1618 = vrot.lane.b32.xlu0 %v1565, 112
      %v1619 = vpop.permute.xlu0 %1618
      %1620 = vrot.lane.b32.xlu0 %v1569, 112
      %v1621 = vpop.permute.xlu0 %1620
      %1622 = vrot.lane.b32.xlu0 %v1573, 112
      %v1623 = vpop.permute.xlu0 %1622
      %1624 = vrot.lane.b32.xlu0 %v1577, 112
      %v1625 = vpop.permute.xlu0 %1624
      %1626 = vrot.lane.b32.xlu0 %v1581, 112
      %v1627 = vpop.permute.xlu0 %1626
      %1628 = vrot.lane.b32.xlu0 %v1585, 112
      %v1629 = vpop.permute.xlu0 %1628
      %1630 = vrot.lane.b32.xlu0 %v1589, 112
      %v1631 = vpop.permute.xlu0 %1630
      %1632 = vrot.lane.b32.xlu0 %v1593, 112
      %v1633 = vpop.permute.xlu0 %1632
      %1634 = vrot.lane.b32.xlu0 %v1597, 112
      %v1635 = vpop.permute.xlu0 %1634
      %1636 = vrot.lane.b32.xlu0 %v1601, 112
      %v1637 = vpop.permute.xlu0 %1636
      %1638 = vrot.lane.b32.xlu0 %v1605, 112
      %v1639 = vpop.permute.xlu0 %1638
      %1640 = vrot.lane.b32.xlu0 %v1609, 112
      %v1641 = vpop.permute.xlu0 %1640
      %1658 = vst.msk [vmem:[%s332 + $0x9] sm:$0x1] %vm885, %v1611
      %1659 = vst.msk [vmem:[%s332 + $0x19] sm:$0x1] %vm885, %v1613
      %1660 = vst.msk [vmem:[%s332 + $0x29] sm:$0x1] %vm885, %v1615
      %1661 = vst.msk [vmem:[%s332 + $0x39] sm:$0x1] %vm885, %v1617
      %1662 = vst.msk [vmem:[%s332 + $0x49] sm:$0x1] %vm885, %v1619
      %1663 = vst.msk [vmem:[%s332 + $0x59] sm:$0x1] %vm885, %v1621
      %1664 = vst.msk [vmem:[%s332 + $0x69] sm:$0x1] %vm885, %v1623
      %1665 = vst.msk [vmem:[%s332 + $0x79] sm:$0x1] %vm885, %v1625
      %1666 = vst.msk [vmem:[%s332 + $0x89] sm:$0x1] %vm885, %v1627
      %1667 = vst.msk [vmem:[%s332 + $0x99] sm:$0x1] %vm885, %v1629
      %1668 = vst.msk [vmem:[%s332 + $0xa9] sm:$0x1] %vm885, %v1631
      %1669 = vst.msk [vmem:[%s332 + $0xb9] sm:$0x1] %vm885, %v1633
      %1670 = vst.msk [vmem:[%s332 + $0xc9] sm:$0x1] %vm885, %v1635
      %1671 = vst.msk [vmem:[%s332 + $0xd9] sm:$0x1] %vm885, %v1637
      %1672 = vst.msk [vmem:[%s332 + $0xe9] sm:$0x1] %vm885, %v1639
      %1673 = vst.msk [vmem:[%s332 + $0xf9] sm:$0x1] %vm885, %v1641
      %1674 = vrot.lane.b32.xlu0 %v1549, 96
      %v1675 = vpop.permute.xlu0 %1674
      %1676 = vrot.lane.b32.xlu0 %v1553, 96
      %v1677 = vpop.permute.xlu0 %1676
      %1678 = vrot.lane.b32.xlu0 %v1557, 96
      %v1679 = vpop.permute.xlu0 %1678
      %1680 = vrot.lane.b32.xlu0 %v1561, 96
      %v1681 = vpop.permute.xlu0 %1680
      %1682 = vrot.lane.b32.xlu0 %v1565, 96
      %v1683 = vpop.permute.xlu0 %1682
      %1684 = vrot.lane.b32.xlu0 %v1569, 96
      %v1685 = vpop.permute.xlu0 %1684
      %1686 = vrot.lane.b32.xlu0 %v1573, 96
      %v1687 = vpop.permute.xlu0 %1686
      %1688 = vrot.lane.b32.xlu0 %v1577, 96
      %v1689 = vpop.permute.xlu0 %1688
      %1690 = vrot.lane.b32.xlu0 %v1581, 96
      %v1691 = vpop.permute.xlu0 %1690
      %1692 = vrot.lane.b32.xlu0 %v1585, 96
      %v1693 = vpop.permute.xlu0 %1692
      %1694 = vrot.lane.b32.xlu0 %v1589, 96
      %v1695 = vpop.permute.xlu0 %1694
      %1696 = vrot.lane.b32.xlu0 %v1593, 96
      %v1697 = vpop.permute.xlu0 %1696
      %1698 = vrot.lane.b32.xlu0 %v1597, 96
      %v1699 = vpop.permute.xlu0 %1698
      %1700 = vrot.lane.b32.xlu0 %v1601, 96
      %v1701 = vpop.permute.xlu0 %1700
      %1702 = vrot.lane.b32.xlu0 %v1605, 96
      %v1703 = vpop.permute.xlu0 %1702
      %1704 = vrot.lane.b32.xlu0 %v1609, 96
      %v1705 = vpop.permute.xlu0 %1704
      %1722 = vst.msk [vmem:[%s332 + $0xa] sm:$0x1] %vm885, %v1675
      %1723 = vst.msk [vmem:[%s332 + $0x1a] sm:$0x1] %vm885, %v1677
      %1724 = vst.msk [vmem:[%s332 + $0x2a] sm:$0x1] %vm885, %v1679
      %1725 = vst.msk [vmem:[%s332 + $0x3a] sm:$0x1] %vm885, %v1681
      %1726 = vst.msk [vmem:[%s332 + $0x4a] sm:$0x1] %vm885, %v1683
      %1727 = vst.msk [vmem:[%s332 + $0x5a] sm:$0x1] %vm885, %v1685
      %1728 = vst.msk [vmem:[%s332 + $0x6a] sm:$0x1] %vm885, %v1687
      %1729 = vst.msk [vmem:[%s332 + $0x7a] sm:$0x1] %vm885, %v1689
      %1730 = vst.msk [vmem:[%s332 + $0x8a] sm:$0x1] %vm885, %v1691
      %1731 = vst.msk [vmem:[%s332 + $0x9a] sm:$0x1] %vm885, %v1693
      %1732 = vst.msk [vmem:[%s332 + $0xaa] sm:$0x1] %vm885, %v1695
      %1733 = vst.msk [vmem:[%s332 + $0xba] sm:$0x1] %vm885, %v1697
      %1734 = vst.msk [vmem:[%s332 + $0xca] sm:$0x1] %vm885, %v1699
      %1735 = vst.msk [vmem:[%s332 + $0xda] sm:$0x1] %vm885, %v1701
      %1736 = vst.msk [vmem:[%s332 + $0xea] sm:$0x1] %vm885, %v1703
      %1737 = vst.msk [vmem:[%s332 + $0xfa] sm:$0x1] %vm885, %v1705
      %1738 = vrot.lane.b32.xlu0 %v1549, 80
      %v1739 = vpop.permute.xlu0 %1738
      %1740 = vrot.lane.b32.xlu0 %v1553, 80
      %v1741 = vpop.permute.xlu0 %1740
      %1742 = vrot.lane.b32.xlu0 %v1557, 80
      %v1743 = vpop.permute.xlu0 %1742
      %1744 = vrot.lane.b32.xlu0 %v1561, 80
      %v1745 = vpop.permute.xlu0 %1744
      %1746 = vrot.lane.b32.xlu0 %v1565, 80
      %v1747 = vpop.permute.xlu0 %1746
      %1748 = vrot.lane.b32.xlu0 %v1569, 80
      %v1749 = vpop.permute.xlu0 %1748
      %1750 = vrot.lane.b32.xlu0 %v1573, 80
      %v1751 = vpop.permute.xlu0 %1750
      %1752 = vrot.lane.b32.xlu0 %v1577, 80
      %v1753 = vpop.permute.xlu0 %1752
      %1754 = vrot.lane.b32.xlu0 %v1581, 80
      %v1755 = vpop.permute.xlu0 %1754
      %1756 = vrot.lane.b32.xlu0 %v1585, 80
      %v1757 = vpop.permute.xlu0 %1756
      %1758 = vrot.lane.b32.xlu0 %v1589, 80
      %v1759 = vpop.permute.xlu0 %1758
      %1760 = vrot.lane.b32.xlu0 %v1593, 80
      %v1761 = vpop.permute.xlu0 %1760
      %1762 = vrot.lane.b32.xlu0 %v1597, 80
      %v1763 = vpop.permute.xlu0 %1762
      %1764 = vrot.lane.b32.xlu0 %v1601, 80
      %v1765 = vpop.permute.xlu0 %1764
      %1766 = vrot.lane.b32.xlu0 %v1605, 80
      %v1767 = vpop.permute.xlu0 %1766
      %1768 = vrot.lane.b32.xlu0 %v1609, 80
      %v1769 = vpop.permute.xlu0 %1768
      %1786 = vst.msk [vmem:[%s332 + $0xb] sm:$0x1] %vm885, %v1739
      %1787 = vst.msk [vmem:[%s332 + $0x1b] sm:$0x1] %vm885, %v1741
      %1788 = vst.msk [vmem:[%s332 + $0x2b] sm:$0x1] %vm885, %v1743
      %1789 = vst.msk [vmem:[%s332 + $0x3b] sm:$0x1] %vm885, %v1745
      %1790 = vst.msk [vmem:[%s332 + $0x4b] sm:$0x1] %vm885, %v1747
      %1791 = vst.msk [vmem:[%s332 + $0x5b] sm:$0x1] %vm885, %v1749
      %1792 = vst.msk [vmem:[%s332 + $0x6b] sm:$0x1] %vm885, %v1751
      %1793 = vst.msk [vmem:[%s332 + $0x7b] sm:$0x1] %vm885, %v1753
      %1794 = vst.msk [vmem:[%s332 + $0x8b] sm:$0x1] %vm885, %v1755
      %1795 = vst.msk [vmem:[%s332 + $0x9b] sm:$0x1] %vm885, %v1757
      %1796 = vst.msk [vmem:[%s332 + $0xab] sm:$0x1] %vm885, %v1759
      %1797 = vst.msk [vmem:[%s332 + $0xbb] sm:$0x1] %vm885, %v1761
      %1798 = vst.msk [vmem:[%s332 + $0xcb] sm:$0x1] %vm885, %v1763
      %1799 = vst.msk [vmem:[%s332 + $0xdb] sm:$0x1] %vm885, %v1765
      %1800 = vst.msk [vmem:[%s332 + $0xeb] sm:$0x1] %vm885, %v1767
      %1801 = vst.msk [vmem:[%s332 + $0xfb] sm:$0x1] %vm885, %v1769
      %1802 = vrot.lane.b32.xlu0 %v1549, 64
      %v1803 = vpop.permute.xlu0 %1802
      %1804 = vrot.lane.b32.xlu0 %v1553, 64
      %v1805 = vpop.permute.xlu0 %1804
      %1806 = vrot.lane.b32.xlu0 %v1557, 64
      %v1807 = vpop.permute.xlu0 %1806
      %1808 = vrot.lane.b32.xlu0 %v1561, 64
      %v1809 = vpop.permute.xlu0 %1808
      %1810 = vrot.lane.b32.xlu0 %v1565, 64
      %v1811 = vpop.permute.xlu0 %1810
      %1812 = vrot.lane.b32.xlu0 %v1569, 64
      %v1813 = vpop.permute.xlu0 %1812
      %1814 = vrot.lane.b32.xlu0 %v1573, 64
      %v1815 = vpop.permute.xlu0 %1814
      %1816 = vrot.lane.b32.xlu0 %v1577, 64
      %v1817 = vpop.permute.xlu0 %1816
      %1818 = vrot.lane.b32.xlu0 %v1581, 64
      %v1819 = vpop.permute.xlu0 %1818
      %1820 = vrot.lane.b32.xlu0 %v1585, 64
      %v1821 = vpop.permute.xlu0 %1820
      %1822 = vrot.lane.b32.xlu0 %v1589, 64
      %v1823 = vpop.permute.xlu0 %1822
      %1824 = vrot.lane.b32.xlu0 %v1593, 64
      %v1825 = vpop.permute.xlu0 %1824
      %1826 = vrot.lane.b32.xlu0 %v1597, 64
      %v1827 = vpop.permute.xlu0 %1826
      %1828 = vrot.lane.b32.xlu0 %v1601, 64
      %v1829 = vpop.permute.xlu0 %1828
      %1830 = vrot.lane.b32.xlu0 %v1605, 64
      %v1831 = vpop.permute.xlu0 %1830
      %1832 = vrot.lane.b32.xlu0 %v1609, 64
      %v1833 = vpop.permute.xlu0 %1832
      %1850 = vst.msk [vmem:[%s332 + $0xc] sm:$0x1] %vm885, %v1803
      %1851 = vst.msk [vmem:[%s332 + $0x1c] sm:$0x1] %vm885, %v1805
      %1852 = vst.msk [vmem:[%s332 + $0x2c] sm:$0x1] %vm885, %v1807
      %1853 = vst.msk [vmem:[%s332 + $0x3c] sm:$0x1] %vm885, %v1809
      %1854 = vst.msk [vmem:[%s332 + $0x4c] sm:$0x1] %vm885, %v1811
      %1855 = vst.msk [vmem:[%s332 + $0x5c] sm:$0x1] %vm885, %v1813
      %1856 = vst.msk [vmem:[%s332 + $0x6c] sm:$0x1] %vm885, %v1815
      %1857 = vst.msk [vmem:[%s332 + $0x7c] sm:$0x1] %vm885, %v1817
      %1858 = vst.msk [vmem:[%s332 + $0x8c] sm:$0x1] %vm885, %v1819
      %1859 = vst.msk [vmem:[%s332 + $0x9c] sm:$0x1] %vm885, %v1821
      %1860 = vst.msk [vmem:[%s332 + $0xac] sm:$0x1] %vm885, %v1823
      %1861 = vst.msk [vmem:[%s332 + $0xbc] sm:$0x1] %vm885, %v1825
      %1862 = vst.msk [vmem:[%s332 + $0xcc] sm:$0x1] %vm885, %v1827
      %1863 = vst.msk [vmem:[%s332 + $0xdc] sm:$0x1] %vm885, %v1829
      %1864 = vst.msk [vmem:[%s332 + $0xec] sm:$0x1] %vm885, %v1831
      %1865 = vst.msk [vmem:[%s332 + $0xfc] sm:$0x1] %vm885, %v1833
      %p1866 = scmp.lt.s32.totalorder %s20, 1
      %s1867 = scalar_select %p1866, %s20, 1
      %s1868 = smul.addr %s1867, 32
      %s1869 = smul.addr %s1868, 8
      %s1870 = scalar_lea.vmem %s9, %s1869
      // Predicated region
      $region57: #{net_conv2d_3_forward.1} parent=55 // pred_check
        %p1871 = pneg %p232
      $region58: #{net_conv2d_3_forward.1} parent=55 // pred_check_branch
        %1873 = sbr.rel (%p1871) target = $region60
      $region59: #{net_conv2d_3_forward.1} parent=55 // pred_region
        _
      $region60: #{net_conv2d_3_forward.1} parent=55 // pred_fallthru
        _
    $region56: #{net_conv2d_3_forward.1} parent=5 // pred_fallthru
      _
    %p1874 = scmp.le.s32.totalorder 2, %s15
    // Predicated region
    $region61: #{net_conv2d_3_forward.1} parent=5 // pred_check
      %p1875 = pneg %p1874
    $region62: #{net_conv2d_3_forward.1} parent=5 // pred_check_branch
      %1877 = sbr.rel (%p1875) target = $region64
    $region63: #{net_conv2d_3_forward.1} parent=5 // pred_region
      %s1878 = ssub.s32 %s15, 2
      // Predicated region
      $region65: #{net_conv2d_3_forward.1} parent=63 // pred_check
        %p1879 = pneg %p238
      $region66: #{net_conv2d_3_forward.1} parent=63 // pred_check_branch
        %1881 = sbr.rel (%p1879) target = $region68
      $region67: #{net_conv2d_3_forward.1} parent=63 // pred_region
        %p1882 = scmp.lt.s32.totalorder %s21, 1
        %s1883 = scalar_select %p1882, %s21, 1
        %s1884 = smul.addr %s1883, 32
        %s1885 = smul.addr %s1884, 8
        %s1886 = scalar_lea.vmem %s9, %s1885
      $region68: #{net_conv2d_3_forward.1} parent=63 // pred_fallthru
        _
    $region64: #{net_conv2d_3_forward.1} parent=5 // pred_fallthru
      _
  $region6: #{net_conv2d_3_forward.1} parent=0 // loop_footer
    %s19 = sadd.s32 1, %s15
  $region7: #{net_conv2d_3_forward.1} parent=0 // loop_footer_branch
    %14 = sbr.rel target = $region3
  $region8: #{net_conv2d_3_forward.1} parent=0 // loop_exit
    _

</llo_original>
